<compile_context>
chip_gen: v7x
topology: tpu7x:2x2x1
jax: 0.10.0
libtpu: 0.0.40
codegen_flags: <defaults>
</compile_context>

<pallas_src>
import functools

import jax
import jax.numpy as jnp
from jax.experimental import pallas as pl
from jax.experimental.pallas import tpu as pltpu


# ----------------------------------------------------------------------------
# Parameter initialization (mirrors the torch module's inits)
# ----------------------------------------------------------------------------
def _xavier_uniform(key, fan_in, fan_out):
    limit = float(jnp.sqrt(6.0 / (fan_in + fan_out)))
    return jax.random.uniform(key, (fan_in, fan_out), jnp.float32, -limit, limit)


def _trunc_normal(key, n, std=0.5):
    return jax.random.truncated_normal(key, -2.0, 2.0, (n,), jnp.float32) * std


def _exp_unit_weight(key, fan_in, fan_out):
    # torch.nn.init.uniform_(w, a=-3.0, b=0.0)
    return jax.random.uniform(key, (fan_in, fan_out), jnp.float32, -3.0, 0.0)


def init_params(key, cfg):
    K, M = cfg["num_classes"], cfg["phi_in_dim"]
    L, Wd, Dout = cfg["latent_dim"], cfg["deepset_width"], cfg["deepset_out_dim"]
    exp_s, relu_s, conf_s = (cfg["exp_unit_size"], cfg["relu_unit_size"],
                             cfg["conf_unit_size"])
    n_layers = len(exp_s)
    keys = iter(jax.random.split(key, 64))
    p = {}

    # DeepSet invariant model.
    # TODO(synk): create_deep_set_nn is not defined in the spec; we assume the
    #   standard form phi = Linear(M,Wd)->ReLU->Linear(Wd,L)->ReLU, sum-pool
    #   over the set, rho = Linear(L,Wd)->ReLU->Linear(Wd,Dout).
    p["phi1_w"], p["phi1_b"] = _xavier_uniform(next(keys), M, Wd), _trunc_normal(next(keys), Wd)
    p["phi2_w"], p["phi2_b"] = _xavier_uniform(next(keys), Wd, L), _trunc_normal(next(keys), L)
    p["rho1_w"], p["rho1_b"] = _xavier_uniform(next(keys), L, Wd), _trunc_normal(next(keys), Wd)
    p["rho2_w"], p["rho2_b"] = _xavier_uniform(next(keys), Wd, Dout), _trunc_normal(next(keys), Dout)

    # Scalable monotonic network; its input is [mono (M) | deepset_out (Dout)].
    p["exp_w"], p["exp_b"] = [], []
    p["conf_w"], p["conf_b"] = [], []
    p["relu_w"], p["relu_b"] = [], []
    for i in range(n_layers):
        exp_in = M if i == 0 else exp_s[i - 1] + conf_s[i - 1]
        rc_in = Dout if i == 0 else relu_s[i - 1]
        p["exp_w"].append(_exp_unit_weight(next(keys), exp_in, exp_s[i]))
        p["exp_b"].append(jnp.zeros((exp_s[i],), jnp.float32))          # ExpUnit bias = zeros
        p["conf_w"].append(_xavier_uniform(next(keys), rc_in, conf_s[i]))
        p["conf_b"].append(_trunc_normal(next(keys), conf_s[i]))
        p["relu_w"].append(_xavier_uniform(next(keys), rc_in, relu_s[i]))
        p["relu_b"].append(_trunc_normal(next(keys), relu_s[i]))

    fc_in = exp_s[-1] + conf_s[-1] + relu_s[-1]
    p["fc_w"] = _xavier_uniform(next(keys), fc_in, 1)                    # FCLayer_notexp
    p["fc_b"] = _trunc_normal(next(keys), 1)
    p["bias_0"] = jnp.zeros((1,), jnp.float32)                           # torch: zeros(1)
    return p


# ----------------------------------------------------------------------------
# Weight packing: block-structured, zero-padded slabs (one matmul per layer)
# ----------------------------------------------------------------------------
def pack_params(p, cfg):
    K, M = cfg["num_classes"], cfg["phi_in_dim"]
    L, Dout = cfg["latent_dim"], cfg["deepset_out_dim"]
    exp_s, relu_s, conf_s = (cfg["exp_unit_size"], cfg["relu_unit_size"],
                             cfg["conf_unit_size"])
    n_layers = len(exp_s)
    eye_k = jnp.eye(K, dtype=jnp.float32)

    def blk(w):                      # same per-class weights -> block diagonal
        return jnp.kron(eye_k, w)

    def tiled(b):                    # per-class tiled bias as (1, K*N) row
        return jnp.tile(b, K).reshape(1, -1)

    def stream_mask(ne, nc, nr):     # 1 -> smooth-clip cols, 0 -> relu cols
        m = jnp.concatenate([jnp.ones((ne + nc,), jnp.float32),
                             jnp.zeros((nr,), jnp.float32)])
        return jnp.tile(m, K).reshape(1, -1)

    packed = []
    # DeepSet phi (fused over all K classes).
    packed += [blk(p["phi1_w"]), tiled(p["phi1_b"])]
    packed += [blk(p["phi2_w"]), tiled(p["phi2_b"])]
    # Leave-one-out sum pooling expressed as a single 0/1 matmul.
    packed += [jnp.kron(jnp.ones((K, K), jnp.float32) - eye_k,
                        jnp.eye(L, dtype=jnp.float32))]
    # DeepSet rho.
    packed += [blk(p["rho1_w"]), tiled(p["rho1_b"])]
    packed += [blk(p["rho2_w"]), tiled(p["rho2_b"])]

    sizes = [exp_s[i] + conf_s[i] + relu_s[i] for i in range(n_layers)]

    # SMNN layer 0: mono features come straight from the raw x block (the
    # column gather is folded into the rows of `a0`), the non-mono features
    # are the fused DeepSet outputs (`b0w`).  exp(W) is pre-applied here.
    ne, nc, nr = exp_s[0], conf_s[0], relu_s[0]
    a0 = jnp.zeros((M, sizes[0]), jnp.float32).at[:, :ne].set(jnp.exp(p["exp_w"][0]))
    b0w = jnp.zeros((Dout, sizes[0]), jnp.float32)
    b0w = b0w.at[:, ne:ne + nc].set(p["conf_w"][0])
    b0w = b0w.at[:, ne + nc:].set(p["relu_w"][0])
    bias0 = jnp.concatenate([p["exp_b"][0], p["conf_b"][0], p["relu_b"][0]])
    packed += [blk(a0), blk(b0w), tiled(bias0), stream_mask(ne, nc, nr)]

    # SMNN layers i>0: input block layout per class is [exp | conf | relu].
    for i in range(1, n_layers):
        pe, pc = exp_s[i - 1], conf_s[i - 1]
        ne, nc, nr = exp_s[i], conf_s[i], relu_s[i]
        w = jnp.zeros((sizes[i - 1], sizes[i]), jnp.float32)
        w = w.at[:pe + pc, :ne].set(jnp.exp(p["exp_w"][i]))
        w = w.at[pe + pc:, ne:ne + nc].set(p["conf_w"][i])
        w = w.at[pe + pc:, ne + nc:].set(p["relu_w"][i])
        bi = jnp.concatenate([p["exp_b"][i], p["conf_b"][i], p["relu_b"][i]])
        packed += [blk(w), tiled(bi), stream_mask(ne, nc, nr)]

    # Final projection: one (K*S_last, K+1) matmul producing the whole output
    # row; column 0 has a zero weight column and bias_0 -> out[:, 0] = bias_0.
    s_last = sizes[-1]
    wfc = jnp.concatenate([jnp.zeros((K * s_last, 1), jnp.float32),
                           jnp.kron(eye_k, p["fc_w"])], axis=1)
    bout = jnp.concatenate([p["bias_0"], jnp.tile(p["fc_b"], K)]).reshape(1, -1)
    packed += [wfc, bout]
    return packed


# ----------------------------------------------------------------------------
# Pallas kernel (one batch tile per grid step; all weights VMEM resident)
# ----------------------------------------------------------------------------
def _mixed_activation(u, mask):
    # mask==1: 0.99*clip(u,0,1)+0.01*u (Exp/Confluence units); mask==0: relu.
    clipped = 0.99 * jnp.clip(u, 0.0, 1.0) + 0.01 * u
    return jnp.where(mask > 0.0, clipped, jnp.maximum(u, 0.0))


def _fused_forward_kernel(x_ref, *refs, n_smnn_layers):
    out_ref = refs[-1]
    it = iter(refs[:-1])

    def nxt():
        return next(it)[...]

    def mm(a, b):
        return jnp.dot(a, b, preferred_element_type=jnp.float32)

    x = x_ref[...]                                       # (TB, K*M)

    # ---- DeepSet phi, all K classes fused via block-diagonal weights ----
    h = jnp.maximum(mm(x, nxt()) + nxt(), 0.0)           # (TB, K*width)
    h = jnp.maximum(mm(h, nxt()) + nxt(), 0.0)           # (TB, K*latent)
    # Leave-one-out sum pooling: single 0/1-mask matmul (no lane gathers).
    pooled = mm(h, nxt())                                # (TB, K*latent)
    # ---- DeepSet rho ----
    r = jnp.maximum(mm(pooled, nxt()) + nxt(), 0.0)      # (TB, K*width)
    ds = mm(r, nxt()) + nxt()                            # (TB, K*ds_out)

    # ---- ScalableMonotonicNN: one matmul + one masked activation per layer ----
    a0, b0w, bias0, m0 = nxt(), nxt(), nxt(), nxt()
    act = _mixed_activation(mm(x, a0) + mm(ds, b0w) + bias0, m0)
    for _ in range(1, n_smnn_layers):
        w, b, m = nxt(), nxt(), nxt()
        act = _mixed_activation(mm(act, w) + b, m)

    # ---- final projection straight to the lane-dense (K+1)-wide output ----
    out = mm(act, nxt()) + nxt()                         # (TB, K+1)
    out_ref[...] = out.astype(out_ref.dtype)


def _round_up(a, b):
    return (a + b - 1) // b * b


def deepset_smnn_forward(x, params, cfg, tile_b=512):
    """Fused forward: single pallas_call with a batch-tiled parallel grid."""
    x = jnp.asarray(x, jnp.float32)
    if x.ndim == 1:
        x = x[None, :]
    K, M = cfg["num_classes"], cfg["phi_in_dim"]
    assert x.shape[1] == K * M
    B = x.shape[0]

    packed = pack_params(params, cfg)
    n_layers = len(cfg["exp_unit_size"])

    tile_b = max(8, min(tile_b, _round_up(B, 8)))
    b_pad = _round_up(B, tile_b)
    if b_pad != B:
        x = jnp.pad(x, ((0, b_pad - B), (0, 0)))
    grid = (b_pad // tile_b,)

    kernel = functools.partial(_fused_forward_kernel, n_smnn_layers=n_layers)

    # x / out stream through the grid; every weight slab gets a constant
    # index_map so it is DMA'd once and stays VMEM resident across steps.
    in_specs = [pl.BlockSpec((tile_b, K * M), lambda i: (i, 0))]
    in_specs += [pl.BlockSpec(w.shape, lambda i: (0, 0)) for w in packed]

    out = pl.pallas_call(
        kernel,
        out_shape=jax.ShapeDtypeStruct((b_pad, K + 1), jnp.float32),
        grid=grid,
        in_specs=in_specs,
        out_specs=pl.BlockSpec((tile_b, K + 1), lambda i: (i, 0)),
        compiler_params=pltpu.CompilerParams(
            dimension_semantics=("parallel",)),
    )(x, *packed)
    return out[:B]


# ----------------------------------------------------------------------------
# Pure-JAX reference (literal mirror of the PyTorch forward)
# ----------------------------------------------------------------------------
def reference_forward(x, p, cfg):
    x = jnp.asarray(x, jnp.float32)
    if x.ndim == 1:
        x = x[None, :]
    K, M = cfg["num_classes"], cfg["phi_in_dim"]
    n_layers = len(cfg["exp_unit_size"])
    B = x.shape[0]

    def phi(e):
        h = jnp.maximum(e @ p["phi1_w"] + p["phi1_b"], 0.0)
        return jnp.maximum(h @ p["phi2_w"] + p["phi2_b"], 0.0)

    def rho(v):
        h = jnp.maximum(v @ p["rho1_w"] + p["rho1_b"], 0.0)
        return h @ p["rho2_w"] + p["rho2_b"]

    def smooth_clip(u):
        return (1 - 0.01) * jnp.clip(u, 0.0, 1.0) + 0.01 * u

    def smnn(z):
        x_mono, x_nm = z[:, :M], z[:, M:]
        e = c = r = None
        for i in range(n_layers):
            if i == 0:
                e = smooth_clip(x_mono @ jnp.exp(p["exp_w"][i]) + p["exp_b"][i])
                c = smooth_clip(x_nm @ p["conf_w"][i] + p["conf_b"][i])
                r = jnp.maximum(x_nm @ p["relu_w"][i] + p["relu_b"][i], 0.0)
            else:
                e = smooth_clip(e @ jnp.exp(p["exp_w"][i]) + p["exp_b"][i])
                c = smooth_clip(r @ p["conf_w"][i] + p["conf_b"][i])
                r = jnp.maximum(r @ p["relu_w"][i] + p["relu_b"][i], 0.0)
            e = jnp.concatenate([e, c], axis=1)
        return jnp.concatenate([e, r], axis=1) @ p["fc_w"] + p["fc_b"]

    cols = [jnp.full((B, 1), p["bias_0"][0])]
    for k in range(K):
        mono = x[:, k * M:(k + 1) * M]
        others = jnp.concatenate([x[:, :k * M], x[:, (k + 1) * M:]],
                                 axis=1).reshape(B, K - 1, M)
        inv = rho(jnp.sum(phi(others), axis=1))
        cols.append(smnn(jnp.concatenate([mono, inv], axis=1)))
    return jnp.concatenate(cols, axis=1)


# ----------------------------------------------------------------------------
if __name__ == "__main__":
    cfg = dict(
        num_classes=4,
        phi_in_dim=3,
        latent_dim=32,
        deepset_width=16,
        deepset_out_dim=16,
        exp_unit_size=(32, 16),
        relu_unit_size=(32, 16),
        conf_unit_size=(32, 16),
    )
    key = jax.random.PRNGKey(0)
    k_par, k_x1, k_x2 = jax.random.split(key, 3)
    params = init_params(k_par, cfg)
    feat = cfg["num_classes"] * cfg["phi_in_dim"]

    # Small smoke test (single grid step).
    x_small = jax.random.normal(k_x1, (16, feat), jnp.float32)
    out_small = jax.block_until_ready(deepset_smnn_forward(x_small, params, cfg))
    ref_small = reference_forward(x_small, params, cfg)
    assert out_small.shape == (16, cfg["num_classes"] + 1), out_small.shape
    assert jnp.allclose(out_small, ref_small, atol=1e-4, rtol=1e-4), (
        float(jnp.max(jnp.abs(out_small - ref_small))))

    # Larger batch exercising the batch-tiled grid and the padding path.
    x_big = jax.random.normal(k_x2, (1000, feat), jnp.float32)
    out_big = jax.block_until_ready(
        deepset_smnn_forward(x_big, params, cfg, tile_b=256))
    ref_big = reference_forward(x_big, params, cfg)
    assert out_big.shape == (1000, cfg["num_classes"] + 1), out_big.shape
    assert jnp.allclose(out_big, ref_big, atol=1e-4, rtol=1e-4), (
        float(jnp.max(jnp.abs(out_big - ref_big))))

    print("KERNEL_OK")
</pallas_src>

<mosaic_0001>
module attributes {stable_mosaic.version = 11 : i64} {
  func.func @_fused_forward_kernel(%arg0: i32, %arg1: memref<16x12xf32, #tpu.memory_space<vmem>>, %arg2: memref<12x64xf32, #tpu.memory_space<vmem>>, %arg3: memref<1x64xf32, #tpu.memory_space<vmem>>, %arg4: memref<64x128xf32, #tpu.memory_space<vmem>>, %arg5: memref<1x128xf32, #tpu.memory_space<vmem>>, %arg6: memref<128x128xf32, #tpu.memory_space<vmem>>, %arg7: memref<128x64xf32, #tpu.memory_space<vmem>>, %arg8: memref<1x64xf32, #tpu.memory_space<vmem>>, %arg9: memref<64x64xf32, #tpu.memory_space<vmem>>, %arg10: memref<1x64xf32, #tpu.memory_space<vmem>>, %arg11: memref<12x384xf32, #tpu.memory_space<vmem>>, %arg12: memref<64x384xf32, #tpu.memory_space<vmem>>, %arg13: memref<1x384xf32, #tpu.memory_space<vmem>>, %arg14: memref<1x384xf32, #tpu.memory_space<vmem>>, %arg15: memref<384x192xf32, #tpu.memory_space<vmem>>, %arg16: memref<1x192xf32, #tpu.memory_space<vmem>>, %arg17: memref<1x192xf32, #tpu.memory_space<vmem>>, %arg18: memref<192x5xf32, #tpu.memory_space<vmem>>, %arg19: memref<1x5xf32, #tpu.memory_space<vmem>>, %arg20: memref<16x5xf32, #tpu.memory_space<vmem>>) attributes {dimension_semantics = [#tpu.dimension_semantics<parallel>], iteration_bounds = array<i64: 1>, scalar_prefetch = 0 : i64, scratch_operands = 0 : i64, tpu.core_type = #tpu.core_type<tc>, window_params = [{transform_indices = @transform_0, window_bounds = array<i64: 16, 12>}, {pipeline_mode = #tpu.pipeline_mode<synchronous>, transform_indices = @transform_1, window_bounds = array<i64: 12, 64>}, {pipeline_mode = #tpu.pipeline_mode<synchronous>, transform_indices = @transform_2, window_bounds = array<i64: 1, 64>}, {pipeline_mode = #tpu.pipeline_mode<synchronous>, transform_indices = @transform_3, window_bounds = array<i64: 64, 128>}, {pipeline_mode = #tpu.pipeline_mode<synchronous>, transform_indices = @transform_4, window_bounds = array<i64: 1, 128>}, {pipeline_mode = #tpu.pipeline_mode<synchronous>, transform_indices = @transform_5, window_bounds = array<i64: 128, 128>}, {pipeline_mode = #tpu.pipeline_mode<synchronous>, transform_indices = @transform_6, window_bounds = array<i64: 128, 64>}, {pipeline_mode = #tpu.pipeline_mode<synchronous>, transform_indices = @transform_7, window_bounds = array<i64: 1, 64>}, {pipeline_mode = #tpu.pipeline_mode<synchronous>, transform_indices = @transform_8, window_bounds = array<i64: 64, 64>}, {pipeline_mode = #tpu.pipeline_mode<synchronous>, transform_indices = @transform_9, window_bounds = array<i64: 1, 64>}, {pipeline_mode = #tpu.pipeline_mode<synchronous>, transform_indices = @transform_10, window_bounds = array<i64: 12, 384>}, {pipeline_mode = #tpu.pipeline_mode<synchronous>, transform_indices = @transform_11, window_bounds = array<i64: 64, 384>}, {pipeline_mode = #tpu.pipeline_mode<synchronous>, transform_indices = @transform_12, window_bounds = array<i64: 1, 384>}, {pipeline_mode = #tpu.pipeline_mode<synchronous>, transform_indices = @transform_13, window_bounds = array<i64: 1, 384>}, {pipeline_mode = #tpu.pipeline_mode<synchronous>, transform_indices = @transform_14, window_bounds = array<i64: 384, 192>}, {pipeline_mode = #tpu.pipeline_mode<synchronous>, transform_indices = @transform_15, window_bounds = array<i64: 1, 192>}, {pipeline_mode = #tpu.pipeline_mode<synchronous>, transform_indices = @transform_16, window_bounds = array<i64: 1, 192>}, {pipeline_mode = #tpu.pipeline_mode<synchronous>, transform_indices = @transform_17, window_bounds = array<i64: 192, 5>}, {pipeline_mode = #tpu.pipeline_mode<synchronous>, transform_indices = @transform_18, window_bounds = array<i64: 1, 5>}, {transform_indices = @transform_19, window_bounds = array<i64: 16, 5>}]} {
    %c0 = arith.constant 0 : index
    %c0_0 = arith.constant 0 : index
    %0 = vector.load %arg1[%c0, %c0_0] : memref<16x12xf32, #tpu.memory_space<vmem>>, vector<16x12xf32>
    %c0_1 = arith.constant 0 : index
    %c0_2 = arith.constant 0 : index
    %1 = vector.load %arg2[%c0_1, %c0_2] : memref<12x64xf32, #tpu.memory_space<vmem>>, vector<12x64xf32>
    %cst = arith.constant dense<0.000000e+00> : vector<16x64xf32>
    %2 = tpu.matmul %0, %1, %cst {dimension_numbers = #tpu.dot_dimension_numbers<[1], [0], [0], [1], [0, 0, 1, 1], [], []>} : vector<16x12xf32>, vector<12x64xf32>, vector<16x64xf32> -> vector<16x64xf32>
    %c0_3 = arith.constant 0 : index
    %c0_4 = arith.constant 0 : index
    %3 = vector.load %arg3[%c0_3, %c0_4] : memref<1x64xf32, #tpu.memory_space<vmem>>, vector<1x64xf32>
    %4 = vector.broadcast %3 : vector<1x64xf32> to vector<16x64xf32>
    %5 = arith.addf %2, %4 : vector<16x64xf32>
    %cst_5 = arith.constant 0.000000e+00 : f32
    %6 = vector.broadcast %cst_5 : f32 to vector<16x64xf32>
    %7 = arith.maximumf %5, %6 : vector<16x64xf32>
    %c0_6 = arith.constant 0 : index
    %c0_7 = arith.constant 0 : index
    %8 = vector.load %arg4[%c0_6, %c0_7] : memref<64x128xf32, #tpu.memory_space<vmem>>, vector<64x128xf32>
    %cst_8 = arith.constant dense<0.000000e+00> : vector<16x128xf32>
    %9 = tpu.matmul %7, %8, %cst_8 {dimension_numbers = #tpu.dot_dimension_numbers<[1], [0], [0], [1], [0, 0, 1, 1], [], []>} : vector<16x64xf32>, vector<64x128xf32>, vector<16x128xf32> -> vector<16x128xf32>
    %c0_9 = arith.constant 0 : index
    %c0_10 = arith.constant 0 : index
    %10 = vector.load %arg5[%c0_9, %c0_10] : memref<1x128xf32, #tpu.memory_space<vmem>>, vector<1x128xf32>
    %11 = vector.broadcast %10 : vector<1x128xf32> to vector<16x128xf32>
    %12 = arith.addf %9, %11 : vector<16x128xf32>
    %cst_11 = arith.constant 0.000000e+00 : f32
    %13 = vector.broadcast %cst_11 : f32 to vector<16x128xf32>
    %14 = arith.maximumf %12, %13 : vector<16x128xf32>
    %c0_12 = arith.constant 0 : index
    %c0_13 = arith.constant 0 : index
    %15 = vector.load %arg6[%c0_12, %c0_13] : memref<128x128xf32, #tpu.memory_space<vmem>>, vector<128x128xf32>
    %cst_14 = arith.constant dense<0.000000e+00> : vector<16x128xf32>
    %16 = tpu.matmul %14, %15, %cst_14 {dimension_numbers = #tpu.dot_dimension_numbers<[1], [0], [0], [1], [0, 0, 1, 1], [], []>} : vector<16x128xf32>, vector<128x128xf32>, vector<16x128xf32> -> vector<16x128xf32>
    %c0_15 = arith.constant 0 : index
    %c0_16 = arith.constant 0 : index
    %17 = vector.load %arg7[%c0_15, %c0_16] : memref<128x64xf32, #tpu.memory_space<vmem>>, vector<128x64xf32>
    %cst_17 = arith.constant dense<0.000000e+00> : vector<16x64xf32>
    %18 = tpu.matmul %16, %17, %cst_17 {dimension_numbers = #tpu.dot_dimension_numbers<[1], [0], [0], [1], [0, 0, 1, 1], [], []>} : vector<16x128xf32>, vector<128x64xf32>, vector<16x64xf32> -> vector<16x64xf32>
    %c0_18 = arith.constant 0 : index
    %c0_19 = arith.constant 0 : index
    %19 = vector.load %arg8[%c0_18, %c0_19] : memref<1x64xf32, #tpu.memory_space<vmem>>, vector<1x64xf32>
    %20 = vector.broadcast %19 : vector<1x64xf32> to vector<16x64xf32>
    %21 = arith.addf %18, %20 : vector<16x64xf32>
    %cst_20 = arith.constant 0.000000e+00 : f32
    %22 = vector.broadcast %cst_20 : f32 to vector<16x64xf32>
    %23 = arith.maximumf %21, %22 : vector<16x64xf32>
    %c0_21 = arith.constant 0 : index
    %c0_22 = arith.constant 0 : index
    %24 = vector.load %arg9[%c0_21, %c0_22] : memref<64x64xf32, #tpu.memory_space<vmem>>, vector<64x64xf32>
    %cst_23 = arith.constant dense<0.000000e+00> : vector<16x64xf32>
    %25 = tpu.matmul %23, %24, %cst_23 {dimension_numbers = #tpu.dot_dimension_numbers<[1], [0], [0], [1], [0, 0, 1, 1], [], []>} : vector<16x64xf32>, vector<64x64xf32>, vector<16x64xf32> -> vector<16x64xf32>
    %c0_24 = arith.constant 0 : index
    %c0_25 = arith.constant 0 : index
    %26 = vector.load %arg10[%c0_24, %c0_25] : memref<1x64xf32, #tpu.memory_space<vmem>>, vector<1x64xf32>
    %27 = vector.broadcast %26 : vector<1x64xf32> to vector<16x64xf32>
    %28 = arith.addf %25, %27 : vector<16x64xf32>
    %c0_26 = arith.constant 0 : index
    %c0_27 = arith.constant 0 : index
    %29 = vector.load %arg11[%c0_26, %c0_27] : memref<12x384xf32, #tpu.memory_space<vmem>>, vector<12x384xf32>
    %c0_28 = arith.constant 0 : index
    %c0_29 = arith.constant 0 : index
    %30 = vector.load %arg12[%c0_28, %c0_29] : memref<64x384xf32, #tpu.memory_space<vmem>>, vector<64x384xf32>
    %c0_30 = arith.constant 0 : index
    %c0_31 = arith.constant 0 : index
    %31 = vector.load %arg13[%c0_30, %c0_31] : memref<1x384xf32, #tpu.memory_space<vmem>>, vector<1x384xf32>
    %c0_32 = arith.constant 0 : index
    %c0_33 = arith.constant 0 : index
    %32 = vector.load %arg14[%c0_32, %c0_33] : memref<1x384xf32, #tpu.memory_space<vmem>>, vector<1x384xf32>
    %cst_34 = arith.constant dense<0.000000e+00> : vector<16x384xf32>
    %33 = tpu.matmul %0, %29, %cst_34 {dimension_numbers = #tpu.dot_dimension_numbers<[1], [0], [0], [1], [0, 0, 1, 1], [], []>} : vector<16x12xf32>, vector<12x384xf32>, vector<16x384xf32> -> vector<16x384xf32>
    %cst_35 = arith.constant dense<0.000000e+00> : vector<16x384xf32>
    %34 = tpu.matmul %28, %30, %cst_35 {dimension_numbers = #tpu.dot_dimension_numbers<[1], [0], [0], [1], [0, 0, 1, 1], [], []>} : vector<16x64xf32>, vector<64x384xf32>, vector<16x384xf32> -> vector<16x384xf32>
    %35 = arith.addf %33, %34 : vector<16x384xf32>
    %36 = vector.broadcast %31 : vector<1x384xf32> to vector<16x384xf32>
    %37 = arith.addf %35, %36 : vector<16x384xf32>
    %cst_36 = arith.constant 0.000000e+00 : f32
    %cst_37 = arith.constant 1.000000e+00 : f32
    %38 = vector.broadcast %cst_36 : f32 to vector<16x384xf32>
    %39 = arith.maximumf %38, %37 : vector<16x384xf32>
    %40 = vector.broadcast %cst_37 : f32 to vector<16x384xf32>
    %41 = arith.minimumf %40, %39 : vector<16x384xf32>
    %cst_38 = arith.constant 9.900000e-01 : f32
    %42 = vector.broadcast %cst_38 : f32 to vector<16x384xf32>
    %43 = arith.mulf %42, %41 : vector<16x384xf32>
    %cst_39 = arith.constant 0.00999999977 : f32
    %44 = vector.broadcast %cst_39 : f32 to vector<16x384xf32>
    %45 = arith.mulf %44, %37 : vector<16x384xf32>
    %46 = arith.addf %43, %45 : vector<16x384xf32>
    %cst_40 = arith.constant 0.000000e+00 : f32
    %47 = vector.broadcast %cst_40 : f32 to vector<1x384xf32>
    %48 = arith.cmpf ogt, %32, %47 : vector<1x384xf32>
    %cst_41 = arith.constant 0.000000e+00 : f32
    %49 = vector.broadcast %cst_41 : f32 to vector<16x384xf32>
    %50 = arith.maximumf %37, %49 : vector<16x384xf32>
    %51 = vector.shape_cast %48 : vector<1x384xi1> to vector<1x384xi1>
    %52 = vector.broadcast %51 : vector<1x384xi1> to vector<16x384xi1>
    %53 = arith.select %52, %46, %50 : vector<16x384xi1>, vector<16x384xf32>
    %c0_42 = arith.constant 0 : index
    %c0_43 = arith.constant 0 : index
    %54 = vector.load %arg15[%c0_42, %c0_43] : memref<384x192xf32, #tpu.memory_space<vmem>>, vector<384x192xf32>
    %c0_44 = arith.constant 0 : index
    %c0_45 = arith.constant 0 : index
    %55 = vector.load %arg16[%c0_44, %c0_45] : memref<1x192xf32, #tpu.memory_space<vmem>>, vector<1x192xf32>
    %c0_46 = arith.constant 0 : index
    %c0_47 = arith.constant 0 : index
    %56 = vector.load %arg17[%c0_46, %c0_47] : memref<1x192xf32, #tpu.memory_space<vmem>>, vector<1x192xf32>
    %cst_48 = arith.constant dense<0.000000e+00> : vector<16x192xf32>
    %57 = tpu.matmul %53, %54, %cst_48 {dimension_numbers = #tpu.dot_dimension_numbers<[1], [0], [0], [1], [0, 0, 1, 1], [], []>} : vector<16x384xf32>, vector<384x192xf32>, vector<16x192xf32> -> vector<16x192xf32>
    %58 = vector.broadcast %55 : vector<1x192xf32> to vector<16x192xf32>
    %59 = arith.addf %57, %58 : vector<16x192xf32>
    %cst_49 = arith.constant 0.000000e+00 : f32
    %cst_50 = arith.constant 1.000000e+00 : f32
    %60 = vector.broadcast %cst_49 : f32 to vector<16x192xf32>
    %61 = arith.maximumf %60, %59 : vector<16x192xf32>
    %62 = vector.broadcast %cst_50 : f32 to vector<16x192xf32>
    %63 = arith.minimumf %62, %61 : vector<16x192xf32>
    %cst_51 = arith.constant 9.900000e-01 : f32
    %64 = vector.broadcast %cst_51 : f32 to vector<16x192xf32>
    %65 = arith.mulf %64, %63 : vector<16x192xf32>
    %cst_52 = arith.constant 0.00999999977 : f32
    %66 = vector.broadcast %cst_52 : f32 to vector<16x192xf32>
    %67 = arith.mulf %66, %59 : vector<16x192xf32>
    %68 = arith.addf %65, %67 : vector<16x192xf32>
    %cst_53 = arith.constant 0.000000e+00 : f32
    %69 = vector.broadcast %cst_53 : f32 to vector<1x192xf32>
    %70 = arith.cmpf ogt, %56, %69 : vector<1x192xf32>
    %cst_54 = arith.constant 0.000000e+00 : f32
    %71 = vector.broadcast %cst_54 : f32 to vector<16x192xf32>
    %72 = arith.maximumf %59, %71 : vector<16x192xf32>
    %73 = vector.shape_cast %70 : vector<1x192xi1> to vector<1x192xi1>
    %74 = vector.broadcast %73 : vector<1x192xi1> to vector<16x192xi1>
    %75 = arith.select %74, %68, %72 : vector<16x192xi1>, vector<16x192xf32>
    %c0_55 = arith.constant 0 : index
    %c0_56 = arith.constant 0 : index
    %76 = vector.load %arg18[%c0_55, %c0_56] : memref<192x5xf32, #tpu.memory_space<vmem>>, vector<192x5xf32>
    %cst_57 = arith.constant dense<0.000000e+00> : vector<16x5xf32>
    %77 = tpu.matmul %75, %76, %cst_57 {dimension_numbers = #tpu.dot_dimension_numbers<[1], [0], [0], [1], [0, 0, 1, 1], [], []>} : vector<16x192xf32>, vector<192x5xf32>, vector<16x5xf32> -> vector<16x5xf32>
    %c0_58 = arith.constant 0 : index
    %c0_59 = arith.constant 0 : index
    %78 = vector.load %arg19[%c0_58, %c0_59] : memref<1x5xf32, #tpu.memory_space<vmem>>, vector<1x5xf32>
    %79 = vector.broadcast %78 : vector<1x5xf32> to vector<16x5xf32>
    %80 = arith.addf %77, %79 : vector<16x5xf32>
    %c0_60 = arith.constant 0 : index
    %c0_61 = arith.constant 0 : index
    %81 = vector.load %arg20[%c0_60, %c0_61] : memref<16x5xf32, #tpu.memory_space<vmem>>, vector<16x5xf32>
    tpu.vector_store %arg20[%c0_60, %c0_61], %80 {strides = array<i32>} : memref<16x5xf32, #tpu.memory_space<vmem>>, vector<16x5xf32>,
    return
  }
  func.func @transform_0(%arg0: i32) -> (i32, i32) {
    %c0_i32 = arith.constant 0 : i32
    %c0_i32_0 = arith.constant 0 : i32
    return %arg0, %c0_i32 : i32, i32
  }
  func.func @transform_1(%arg0: i32) -> (i32, i32) {
    %c0_i32 = arith.constant 0 : i32
    %c0_i32_0 = arith.constant 0 : i32
    %c0_i32_1 = arith.constant 0 : i32
    return %c0_i32, %c0_i32_0 : i32, i32
  }
  func.func @transform_2(%arg0: i32) -> (i32, i32) {
    %c0_i32 = arith.constant 0 : i32
    %c0_i32_0 = arith.constant 0 : i32
    %c0_i32_1 = arith.constant 0 : i32
    return %c0_i32, %c0_i32_0 : i32, i32
  }
  func.func @transform_3(%arg0: i32) -> (i32, i32) {
    %c0_i32 = arith.constant 0 : i32
    %c0_i32_0 = arith.constant 0 : i32
    %c0_i32_1 = arith.constant 0 : i32
    return %c0_i32, %c0_i32_0 : i32, i32
  }
  func.func @transform_4(%arg0: i32) -> (i32, i32) {
    %c0_i32 = arith.constant 0 : i32
    %c0_i32_0 = arith.constant 0 : i32
    %c0_i32_1 = arith.constant 0 : i32
    return %c0_i32, %c0_i32_0 : i32, i32
  }
  func.func @transform_5(%arg0: i32) -> (i32, i32) {
    %c0_i32 = arith.constant 0 : i32
    %c0_i32_0 = arith.constant 0 : i32
    %c0_i32_1 = arith.constant 0 : i32
    return %c0_i32, %c0_i32_0 : i32, i32
  }
  func.func @transform_6(%arg0: i32) -> (i32, i32) {
    %c0_i32 = arith.constant 0 : i32
    %c0_i32_0 = arith.constant 0 : i32
    %c0_i32_1 = arith.constant 0 : i32
    return %c0_i32, %c0_i32_0 : i32, i32
  }
  func.func @transform_7(%arg0: i32) -> (i32, i32) {
    %c0_i32 = arith.constant 0 : i32
    %c0_i32_0 = arith.constant 0 : i32
    %c0_i32_1 = arith.constant 0 : i32
    return %c0_i32, %c0_i32_0 : i32, i32
  }
  func.func @transform_8(%arg0: i32) -> (i32, i32) {
    %c0_i32 = arith.constant 0 : i32
    %c0_i32_0 = arith.constant 0 : i32
    %c0_i32_1 = arith.constant 0 : i32
    return %c0_i32, %c0_i32_0 : i32, i32
  }
  func.func @transform_9(%arg0: i32) -> (i32, i32) {
    %c0_i32 = arith.constant 0 : i32
    %c0_i32_0 = arith.constant 0 : i32
    %c0_i32_1 = arith.constant 0 : i32
    return %c0_i32, %c0_i32_0 : i32, i32
  }
  func.func @transform_10(%arg0: i32) -> (i32, i32) {
    %c0_i32 = arith.constant 0 : i32
    %c0_i32_0 = arith.constant 0 : i32
    %c0_i32_1 = arith.constant 0 : i32
    return %c0_i32, %c0_i32_0 : i32, i32
  }
  func.func @transform_11(%arg0: i32) -> (i32, i32) {
    %c0_i32 = arith.constant 0 : i32
    %c0_i32_0 = arith.constant 0 : i32
    %c0_i32_1 = arith.constant 0 : i32
    return %c0_i32, %c0_i32_0 : i32, i32
  }
  func.func @transform_12(%arg0: i32) -> (i32, i32) {
    %c0_i32 = arith.constant 0 : i32
    %c0_i32_0 = arith.constant 0 : i32
    %c0_i32_1 = arith.constant 0 : i32
    return %c0_i32, %c0_i32_0 : i32, i32
  }
  func.func @transform_13(%arg0: i32) -> (i32, i32) {
    %c0_i32 = arith.constant 0 : i32
    %c0_i32_0 = arith.constant 0 : i32
    %c0_i32_1 = arith.constant 0 : i32
    return %c0_i32, %c0_i32_0 : i32, i32
  }
  func.func @transform_14(%arg0: i32) -> (i32, i32) {
    %c0_i32 = arith.constant 0 : i32
    %c0_i32_0 = arith.constant 0 : i32
    %c0_i32_1 = arith.constant 0 : i32
    return %c0_i32, %c0_i32_0 : i32, i32
  }
  func.func @transform_15(%arg0: i32) -> (i32, i32) {
    %c0_i32 = arith.constant 0 : i32
    %c0_i32_0 = arith.constant 0 : i32
    %c0_i32_1 = arith.constant 0 : i32
    return %c0_i32, %c0_i32_0 : i32, i32
  }
  func.func @transform_16(%arg0: i32) -> (i32, i32) {
    %c0_i32 = arith.constant 0 : i32
    %c0_i32_0 = arith.constant 0 : i32
    %c0_i32_1 = arith.constant 0 : i32
    return %c0_i32, %c0_i32_0 : i32, i32
  }
  func.func @transform_17(%arg0: i32) -> (i32, i32) {
    %c0_i32 = arith.constant 0 : i32
    %c0_i32_0 = arith.constant 0 : i32
    %c0_i32_1 = arith.constant 0 : i32
    return %c0_i32, %c0_i32_0 : i32, i32
  }
  func.func @transform_18(%arg0: i32) -> (i32, i32) {
    %c0_i32 = arith.constant 0 : i32
    %c0_i32_0 = arith.constant 0 : i32
    %c0_i32_1 = arith.constant 0 : i32
    return %c0_i32, %c0_i32_0 : i32, i32
  }
  func.func @transform_19(%arg0: i32) -> (i32, i32) {
    %c0_i32 = arith.constant 0 : i32
    %c0_i32_0 = arith.constant 0 : i32
    return %arg0, %c0_i32 : i32, i32
  }
}

</mosaic_0001>

<llo_original>
// kernel: tpu_custom_call.1
$region0: #{tpu_custom_call.1}
  #allocation0 [shape = 'u32[]', space=smem, size = 0x4, offset = 0x4, fixed_abs, tag = 'smem constant byte address 0x4 - core index']
  #allocation1 [shape = 'u32[144,128]{1,0:T(1,128)}', space=vmem, size = 0x12000, scoped, tag = 'internal scratch']
  %s0 = inlined_call_operand.vmem [shape: f32[16,12], index: 0, kind: input, shape index: {}]
  %s1 = inlined_call_operand.vmem [shape: f32[12,64], index: 1, kind: input, shape index: {}]
  %s2 = inlined_call_operand.vmem [shape: f32[1,64], index: 2, kind: input, shape index: {}]
  %s3 = inlined_call_operand.vmem [shape: f32[64,128], index: 3, kind: input, shape index: {}]
  %s4 = inlined_call_operand.vmem [shape: f32[1,128], index: 4, kind: input, shape index: {}]
  %s5 = inlined_call_operand.vmem [shape: f32[128,128], index: 5, kind: input, shape index: {}]
  %s6 = inlined_call_operand.vmem [shape: f32[128,64], index: 6, kind: input, shape index: {}]
  %s7 = inlined_call_operand.vmem [shape: f32[1,64], index: 7, kind: input, shape index: {}]
  %s8 = inlined_call_operand.vmem [shape: f32[64,64], index: 8, kind: input, shape index: {}]
  %s9 = inlined_call_operand.vmem [shape: f32[1,64], index: 9, kind: input, shape index: {}]
  %s10 = inlined_call_operand.vmem [shape: f32[12,384], index: 10, kind: input, shape index: {}]
  %s11 = inlined_call_operand.vmem [shape: f32[64,384], index: 11, kind: input, shape index: {}]
  %s12 = inlined_call_operand.vmem [shape: f32[1,384], index: 12, kind: input, shape index: {}]
  %s13 = inlined_call_operand.vmem [shape: f32[1,384], index: 13, kind: input, shape index: {}]
  %s14 = inlined_call_operand.vmem [shape: f32[384,192], index: 14, kind: input, shape index: {}]
  %s15 = inlined_call_operand.vmem [shape: f32[1,192], index: 15, kind: input, shape index: {}]
  %s16 = inlined_call_operand.vmem [shape: f32[1,192], index: 16, kind: input, shape index: {}]
  %s17 = inlined_call_operand.vmem [shape: f32[192,5], index: 17, kind: input, shape index: {}]
  %s18 = inlined_call_operand.vmem [shape: f32[1,5], index: 18, kind: input, shape index: {}]
  %s19 = inlined_call_operand.vmem [shape: f32[16,5], index: 19, kind: output, shape index: {}]
  %s20 = sld [smem:[#allocation0]]
  $region86: #{tpu_custom_call.1} parent=0
    _
  %s22 = ssub.s32 1, %s20
  %s23 = scalar_select 0, %s22, %s20
  // Predicated region
  $region2: #{tpu_custom_call.1} parent=0 // pred_check
    _
  $region3: #{tpu_custom_call.1} parent=0 // pred_check_branch
    %25 = sbr.rel (0) target = $region5
  $region4: #{tpu_custom_call.1} parent=0 // pred_region
    _
  $region5: #{tpu_custom_call.1} parent=0 // pred_fallthru
    _
  // Predicated region
  $region6: #{tpu_custom_call.1} parent=0 // pred_check
    _
  $region7: #{tpu_custom_call.1} parent=0 // pred_check_branch
    %27 = sbr.rel (0) target = $region9
  $region8: #{tpu_custom_call.1} parent=0 // pred_region
    _
  $region9: #{tpu_custom_call.1} parent=0 // pred_fallthru
    _
  // Predicated region
  $region10: #{tpu_custom_call.1} parent=0 // pred_check
    _
  $region11: #{tpu_custom_call.1} parent=0 // pred_check_branch
    %29 = sbr.rel (0) target = $region13
  $region12: #{tpu_custom_call.1} parent=0 // pred_region
    _
  $region13: #{tpu_custom_call.1} parent=0 // pred_fallthru
    _
  // Predicated region
  $region14: #{tpu_custom_call.1} parent=0 // pred_check
    _
  $region15: #{tpu_custom_call.1} parent=0 // pred_check_branch
    %31 = sbr.rel (0) target = $region17
  $region16: #{tpu_custom_call.1} parent=0 // pred_region
    _
  $region17: #{tpu_custom_call.1} parent=0 // pred_fallthru
    _
  // Predicated region
  $region18: #{tpu_custom_call.1} parent=0 // pred_check
    _
  $region19: #{tpu_custom_call.1} parent=0 // pred_check_branch
    %33 = sbr.rel (0) target = $region21
  $region20: #{tpu_custom_call.1} parent=0 // pred_region
    _
  $region21: #{tpu_custom_call.1} parent=0 // pred_fallthru
    _
  // Predicated region
  $region22: #{tpu_custom_call.1} parent=0 // pred_check
    _
  $region23: #{tpu_custom_call.1} parent=0 // pred_check_branch
    %35 = sbr.rel (0) target = $region25
  $region24: #{tpu_custom_call.1} parent=0 // pred_region
    _
  $region25: #{tpu_custom_call.1} parent=0 // pred_fallthru
    _
  // Predicated region
  $region26: #{tpu_custom_call.1} parent=0 // pred_check
    _
  $region27: #{tpu_custom_call.1} parent=0 // pred_check_branch
    %37 = sbr.rel (0) target = $region29
  $region28: #{tpu_custom_call.1} parent=0 // pred_region
    _
  $region29: #{tpu_custom_call.1} parent=0 // pred_fallthru
    _
  // Predicated region
  $region30: #{tpu_custom_call.1} parent=0 // pred_check
    _
  $region31: #{tpu_custom_call.1} parent=0 // pred_check_branch
    %39 = sbr.rel (0) target = $region33
  $region32: #{tpu_custom_call.1} parent=0 // pred_region
    _
  $region33: #{tpu_custom_call.1} parent=0 // pred_fallthru
    _
  // Predicated region
  $region34: #{tpu_custom_call.1} parent=0 // pred_check
    _
  $region35: #{tpu_custom_call.1} parent=0 // pred_check_branch
    %41 = sbr.rel (0) target = $region37
  $region36: #{tpu_custom_call.1} parent=0 // pred_region
    _
  $region37: #{tpu_custom_call.1} parent=0 // pred_fallthru
    _
  // Predicated region
  $region38: #{tpu_custom_call.1} parent=0 // pred_check
    _
  $region39: #{tpu_custom_call.1} parent=0 // pred_check_branch
    %43 = sbr.rel (0) target = $region41
  $region40: #{tpu_custom_call.1} parent=0 // pred_region
    _
  $region41: #{tpu_custom_call.1} parent=0 // pred_fallthru
    _
  // Predicated region
  $region42: #{tpu_custom_call.1} parent=0 // pred_check
    _
  $region43: #{tpu_custom_call.1} parent=0 // pred_check_branch
    %45 = sbr.rel (0) target = $region45
  $region44: #{tpu_custom_call.1} parent=0 // pred_region
    _
  $region45: #{tpu_custom_call.1} parent=0 // pred_fallthru
    _
  // Predicated region
  $region46: #{tpu_custom_call.1} parent=0 // pred_check
    _
  $region47: #{tpu_custom_call.1} parent=0 // pred_check_branch
    %47 = sbr.rel (0) target = $region49
  $region48: #{tpu_custom_call.1} parent=0 // pred_region
    _
  $region49: #{tpu_custom_call.1} parent=0 // pred_fallthru
    _
  // Predicated region
  $region50: #{tpu_custom_call.1} parent=0 // pred_check
    _
  $region51: #{tpu_custom_call.1} parent=0 // pred_check_branch
    %49 = sbr.rel (0) target = $region53
  $region52: #{tpu_custom_call.1} parent=0 // pred_region
    _
  $region53: #{tpu_custom_call.1} parent=0 // pred_fallthru
    _
  // Predicated region
  $region54: #{tpu_custom_call.1} parent=0 // pred_check
    _
  $region55: #{tpu_custom_call.1} parent=0 // pred_check_branch
    %51 = sbr.rel (0) target = $region57
  $region56: #{tpu_custom_call.1} parent=0 // pred_region
    _
  $region57: #{tpu_custom_call.1} parent=0 // pred_fallthru
    _
  // Predicated region
  $region58: #{tpu_custom_call.1} parent=0 // pred_check
    _
  $region59: #{tpu_custom_call.1} parent=0 // pred_check_branch
    %53 = sbr.rel (0) target = $region61
  $region60: #{tpu_custom_call.1} parent=0 // pred_region
    _
  $region61: #{tpu_custom_call.1} parent=0 // pred_fallthru
    _
  // Predicated region
  $region62: #{tpu_custom_call.1} parent=0 // pred_check
    _
  $region63: #{tpu_custom_call.1} parent=0 // pred_check_branch
    %55 = sbr.rel (0) target = $region65
  $region64: #{tpu_custom_call.1} parent=0 // pred_region
    _
  $region65: #{tpu_custom_call.1} parent=0 // pred_fallthru
    _
  // Predicated region
  $region66: #{tpu_custom_call.1} parent=0 // pred_check
    _
  $region67: #{tpu_custom_call.1} parent=0 // pred_check_branch
    %57 = sbr.rel (0) target = $region69
  $region68: #{tpu_custom_call.1} parent=0 // pred_region
    _
  $region69: #{tpu_custom_call.1} parent=0 // pred_fallthru
    _
  // Predicated region
  $region70: #{tpu_custom_call.1} parent=0 // pred_check
    _
  $region71: #{tpu_custom_call.1} parent=0 // pred_check_branch
    %59 = sbr.rel (0) target = $region73
  $region72: #{tpu_custom_call.1} parent=0 // pred_region
    _
  $region73: #{tpu_custom_call.1} parent=0 // pred_fallthru
    _
  // Predicated region
  $region74: #{tpu_custom_call.1} parent=0 // pred_check
    _
  $region75: #{tpu_custom_call.1} parent=0 // pred_check_branch
    %61 = sbr.rel (0) target = $region77
  $region76: #{tpu_custom_call.1} parent=0 // pred_region
    _
  $region77: #{tpu_custom_call.1} parent=0 // pred_fallthru
    _
  %v62 = vld [vmem:[%s0] sm:$0xff]
  %v63 = vld [vmem:[%s0 + $0x8] sm:$0xff]
  %v64 = vld [vmem:[%s1] sm:$0xff]
  %v65 = vld [vmem:[%s1 + $0x8] sm:$0xf]
  %v66 = vld [vmem:[%s2] sm:$0x1]
  %v68 = vlaneseq
  %v69 = vshrl.u32 %v68, 7
  %v70 = vsub.s32 0, %v69
  %v71 = vrot.slane %v66, %v70
  %vm73 = vcmask 97280
  %v75 = vsel %vm73, %v62, 0
  %v78 = vsel %vm73, %v63, 0
  %vm80 = vcmask 1043456
  %v82 = vsel %vm80, %v65, 0
  %84 = vmatprep.subr.mxu0 0.0
  %85 = vmatpush1.msra.mxu0 %v64
  %86 = vmatprep.subr.mxu0 0.0
  %87 = vmatpush1.msra.mxu0 %v82
  %88 = vmatprep.subr.mxu0 0.0
  %89 = vmatpush1.msra.mxu0 0.0
  %90 = vmatprep.subr.mxu0 0.0
  %91 = vmatpush1.msra.mxu0 0.0
  %92 = vmatprep.subr.mxu0 0.0
  %93 = vmatpush1.msra.mxu0 0.0
  %94 = vmatprep.subr.mxu0 0.0
  %95 = vmatpush1.msra.mxu0 0.0
  %96 = vmatprep.subr.mxu0 0.0
  %97 = vmatpush1.msra.mxu0 0.0
  %98 = vmatprep.subr.mxu0 0.0
  %99 = vmatpush1.msra.mxu0 0.0
  %100 = vmatprep.subr.mxu0 0.0
  %101 = vmatpush1.msra.mxu0 0.0
  %102 = vmatprep.subr.mxu0 0.0
  %103 = vmatpush1.msra.mxu0 0.0
  %104 = vmatprep.subr.mxu0 0.0
  %105 = vmatpush1.msra.mxu0 0.0
  %106 = vmatprep.subr.mxu0 0.0
  %107 = vmatpush1.msra.mxu0 0.0
  %108 = vmatprep.subr.mxu0 0.0
  %109 = vmatpush1.msra.mxu0 0.0
  %110 = vmatprep.subr.mxu0 0.0
  %111 = vmatpush1.msra.mxu0 0.0
  %112 = vmatprep.subr.mxu0 0.0
  %113 = vmatpush1.msra.mxu0 0.0
  %114 = vmatprep.subr.mxu0 0.0
  %115 = vmatpush1.msra.mxu0 0.0
  %116 = vmatprep.subr.mxu0 0.0
  %117 = vmatpush1.msra.mxu0 0.0
  %118 = vmatprep.subr.mxu0 0.0
  %119 = vmatpush1.msra.mxu0 0.0
  %120 = vmatprep.subr.mxu0 0.0
  %121 = vmatpush1.msra.mxu0 0.0
  %122 = vmatprep.subr.mxu0 0.0
  %123 = vmatpush1.msra.mxu0 0.0
  %124 = vmatprep.subr.mxu0 0.0
  %125 = vmatpush1.msra.mxu0 0.0
  %126 = vmatprep.subr.mxu0 0.0
  %127 = vmatpush1.msra.mxu0 0.0
  %128 = vmatprep.subr.mxu0 0.0
  %129 = vmatpush1.msra.mxu0 0.0
  %130 = vmatprep.subr.mxu0 0.0
  %131 = vmatpush1.msra.mxu0 0.0
  %132 = vmatprep.subr.mxu0 0.0
  %133 = vmatpush1.msra.mxu0 0.0
  %134 = vmatprep.subr.mxu0 0.0
  %135 = vmatpush1.msra.mxu0 0.0
  %136 = vmatprep.subr.mxu0 0.0
  %137 = vmatpush1.msra.mxu0 0.0
  %138 = vmatprep.subr.mxu0 0.0
  %139 = vmatpush1.msra.mxu0 0.0
  %140 = vmatprep.subr.mxu0 0.0
  %141 = vmatpush1.msra.mxu0 0.0
  %142 = vmatprep.subr.mxu0 0.0
  %143 = vmatpush1.msra.mxu0 0.0
  %144 = vmatprep.subr.mxu0 0.0
  %145 = vmatpush1.msra.mxu0 0.0
  %146 = vmatprep.subr.mxu0 0.0
  %147 = vmatpush1.msra.mxu0 0.0
  %148 = vmatprep.mubr.f32.mxu0 0.0
  %149 = vmatmul.mubr.f32.gmra.mrb[0].mxu0 %v75
  %v150 = vpop.f32.mrb[0].mxu0
  %v151 = vadd.f32 %v71, %v150
  %v152 = vpop.f32.mrb[0].mxu0
  %153 = vmatprep.mubr.f32.mxu0 0.0
  %154 = vmatmul.mubr.f32.gmra.mrb[0].mxu0 %v78
  %v155 = vpop.f32.mrb[0].mxu0
  %v156 = vadd.f32 %v71, %v155
  %v157 = vpop.f32.mrb[0].mxu0
  %158 = vdwg.mxu0
  %v159 = vmax.f32 %v151, 0.0
  %v160 = vmax.f32 %v156, 0.0
  %v161 = vld [vmem:[%s3] sm:$0xff]
  %v162 = vld [vmem:[%s3 + $0x8] sm:$0xff]
  %v163 = vld [vmem:[%s3 + $0x10] sm:$0xff]
  %v164 = vld [vmem:[%s3 + $0x18] sm:$0xff]
  %v165 = vld [vmem:[%s3 + $0x20] sm:$0xff]
  %v166 = vld [vmem:[%s3 + $0x28] sm:$0xff]
  %v167 = vld [vmem:[%s3 + $0x30] sm:$0xff]
  %v168 = vld [vmem:[%s3 + $0x38] sm:$0xff]
  %v169 = vld [vmem:[%s4] sm:$0x1]
  %v171 = vlaneseq
  %v172 = vshrl.u32 %v171, 7
  %v173 = vsub.s32 0, %v172
  %v174 = vrot.slane %v169, %v173
  %vm176 = vcmask 523264
  %v178 = vsel %vm176, %v159, 0
  %v181 = vsel %vm176, %v160, 0
  %183 = vmatprep.subr.mxu0 0.0
  %184 = vmatpush1.msra.mxu0 %v161
  %185 = vmatprep.subr.mxu0 0.0
  %186 = vmatpush1.msra.mxu0 %v162
  %187 = vmatprep.subr.mxu0 0.0
  %188 = vmatpush1.msra.mxu0 %v163
  %189 = vmatprep.subr.mxu0 0.0
  %190 = vmatpush1.msra.mxu0 %v164
  %191 = vmatprep.subr.mxu0 0.0
  %192 = vmatpush1.msra.mxu0 %v165
  %193 = vmatprep.subr.mxu0 0.0
  %194 = vmatpush1.msra.mxu0 %v166
  %195 = vmatprep.subr.mxu0 0.0
  %196 = vmatpush1.msra.mxu0 %v167
  %197 = vmatprep.subr.mxu0 0.0
  %198 = vmatpush1.msra.mxu0 %v168
  %199 = vmatprep.subr.mxu0 0.0
  %200 = vmatpush1.msra.mxu0 0.0
  %201 = vmatprep.subr.mxu0 0.0
  %202 = vmatpush1.msra.mxu0 0.0
  %203 = vmatprep.subr.mxu0 0.0
  %204 = vmatpush1.msra.mxu0 0.0
  %205 = vmatprep.subr.mxu0 0.0
  %206 = vmatpush1.msra.mxu0 0.0
  %207 = vmatprep.subr.mxu0 0.0
  %208 = vmatpush1.msra.mxu0 0.0
  %209 = vmatprep.subr.mxu0 0.0
  %210 = vmatpush1.msra.mxu0 0.0
  %211 = vmatprep.subr.mxu0 0.0
  %212 = vmatpush1.msra.mxu0 0.0
  %213 = vmatprep.subr.mxu0 0.0
  %214 = vmatpush1.msra.mxu0 0.0
  %215 = vmatprep.subr.mxu0 0.0
  %216 = vmatpush1.msra.mxu0 0.0
  %217 = vmatprep.subr.mxu0 0.0
  %218 = vmatpush1.msra.mxu0 0.0
  %219 = vmatprep.subr.mxu0 0.0
  %220 = vmatpush1.msra.mxu0 0.0
  %221 = vmatprep.subr.mxu0 0.0
  %222 = vmatpush1.msra.mxu0 0.0
  %223 = vmatprep.subr.mxu0 0.0
  %224 = vmatpush1.msra.mxu0 0.0
  %225 = vmatprep.subr.mxu0 0.0
  %226 = vmatpush1.msra.mxu0 0.0
  %227 = vmatprep.subr.mxu0 0.0
  %228 = vmatpush1.msra.mxu0 0.0
  %229 = vmatprep.subr.mxu0 0.0
  %230 = vmatpush1.msra.mxu0 0.0
  %231 = vmatprep.subr.mxu0 0.0
  %232 = vmatpush1.msra.mxu0 0.0
  %233 = vmatprep.subr.mxu0 0.0
  %234 = vmatpush1.msra.mxu0 0.0
  %235 = vmatprep.subr.mxu0 0.0
  %236 = vmatpush1.msra.mxu0 0.0
  %237 = vmatprep.subr.mxu0 0.0
  %238 = vmatpush1.msra.mxu0 0.0
  %239 = vmatprep.subr.mxu0 0.0
  %240 = vmatpush1.msra.mxu0 0.0
  %241 = vmatprep.subr.mxu0 0.0
  %242 = vmatpush1.msra.mxu0 0.0
  %243 = vmatprep.subr.mxu0 0.0
  %244 = vmatpush1.msra.mxu0 0.0
  %245 = vmatprep.subr.mxu0 0.0
  %246 = vmatpush1.msra.mxu0 0.0
  %247 = vmatprep.mubr.f32.mxu0 0.0
  %248 = vmatmul.mubr.f32.gmra.mrb[0].mxu0 %v178
  %v249 = vpop.f32.mrb[0].mxu0
  %v250 = vadd.f32 %v174, %v249
  %v251 = vpop.f32.mrb[0].mxu0
  %252 = vmatprep.mubr.f32.mxu0 0.0
  %253 = vmatmul.mubr.f32.gmra.mrb[0].mxu0 %v181
  %v254 = vpop.f32.mrb[0].mxu0
  %v255 = vadd.f32 %v174, %v254
  %v256 = vpop.f32.mrb[0].mxu0
  %257 = vdwg.mxu0
  %v258 = vmax.f32 %v250, 0.0
  %v259 = vmax.f32 %v255, 0.0
  %v260 = vld [vmem:[%s5] sm:$0xff]
  %v261 = vld [vmem:[%s5 + $0x8] sm:$0xff]
  %v262 = vld [vmem:[%s5 + $0x10] sm:$0xff]
  %v263 = vld [vmem:[%s5 + $0x18] sm:$0xff]
  %v264 = vld [vmem:[%s5 + $0x20] sm:$0xff]
  %v265 = vld [vmem:[%s5 + $0x28] sm:$0xff]
  %v266 = vld [vmem:[%s5 + $0x30] sm:$0xff]
  %v267 = vld [vmem:[%s5 + $0x38] sm:$0xff]
  %v268 = vld [vmem:[%s5 + $0x40] sm:$0xff]
  %v269 = vld [vmem:[%s5 + $0x48] sm:$0xff]
  %v270 = vld [vmem:[%s5 + $0x50] sm:$0xff]
  %v271 = vld [vmem:[%s5 + $0x58] sm:$0xff]
  %v272 = vld [vmem:[%s5 + $0x60] sm:$0xff]
  %v273 = vld [vmem:[%s5 + $0x68] sm:$0xff]
  %v274 = vld [vmem:[%s5 + $0x70] sm:$0xff]
  %v275 = vld [vmem:[%s5 + $0x78] sm:$0xff]
  %276 = vmatprep.subr.mxu0 0.0
  %277 = vmatpush1.msra.mxu0 %v260
  %278 = vmatprep.subr.mxu0 0.0
  %279 = vmatpush1.msra.mxu0 %v261
  %280 = vmatprep.subr.mxu0 0.0
  %281 = vmatpush1.msra.mxu0 %v262
  %282 = vmatprep.subr.mxu0 0.0
  %283 = vmatpush1.msra.mxu0 %v263
  %284 = vmatprep.subr.mxu0 0.0
  %285 = vmatpush1.msra.mxu0 %v264
  %286 = vmatprep.subr.mxu0 0.0
  %287 = vmatpush1.msra.mxu0 %v265
  %288 = vmatprep.subr.mxu0 0.0
  %289 = vmatpush1.msra.mxu0 %v266
  %290 = vmatprep.subr.mxu0 0.0
  %291 = vmatpush1.msra.mxu0 %v267
  %292 = vmatprep.subr.mxu0 0.0
  %293 = vmatpush1.msra.mxu0 %v268
  %294 = vmatprep.subr.mxu0 0.0
  %295 = vmatpush1.msra.mxu0 %v269
  %296 = vmatprep.subr.mxu0 0.0
  %297 = vmatpush1.msra.mxu0 %v270
  %298 = vmatprep.subr.mxu0 0.0
  %299 = vmatpush1.msra.mxu0 %v271
  %300 = vmatprep.subr.mxu0 0.0
  %301 = vmatpush1.msra.mxu0 %v272
  %302 = vmatprep.subr.mxu0 0.0
  %303 = vmatpush1.msra.mxu0 %v273
  %304 = vmatprep.subr.mxu0 0.0
  %305 = vmatpush1.msra.mxu0 %v274
  %306 = vmatprep.subr.mxu0 0.0
  %307 = vmatpush1.msra.mxu0 %v275
  %308 = vmatprep.subr.mxu0 0.0
  %309 = vmatpush1.msra.mxu0 0.0
  %310 = vmatprep.subr.mxu0 0.0
  %311 = vmatpush1.msra.mxu0 0.0
  %312 = vmatprep.subr.mxu0 0.0
  %313 = vmatpush1.msra.mxu0 0.0
  %314 = vmatprep.subr.mxu0 0.0
  %315 = vmatpush1.msra.mxu0 0.0
  %316 = vmatprep.subr.mxu0 0.0
  %317 = vmatpush1.msra.mxu0 0.0
  %318 = vmatprep.subr.mxu0 0.0
  %319 = vmatpush1.msra.mxu0 0.0
  %320 = vmatprep.subr.mxu0 0.0
  %321 = vmatpush1.msra.mxu0 0.0
  %322 = vmatprep.subr.mxu0 0.0
  %323 = vmatpush1.msra.mxu0 0.0
  %324 = vmatprep.subr.mxu0 0.0
  %325 = vmatpush1.msra.mxu0 0.0
  %326 = vmatprep.subr.mxu0 0.0
  %327 = vmatpush1.msra.mxu0 0.0
  %328 = vmatprep.subr.mxu0 0.0
  %329 = vmatpush1.msra.mxu0 0.0
  %330 = vmatprep.subr.mxu0 0.0
  %331 = vmatpush1.msra.mxu0 0.0
  %332 = vmatprep.subr.mxu0 0.0
  %333 = vmatpush1.msra.mxu0 0.0
  %334 = vmatprep.subr.mxu0 0.0
  %335 = vmatpush1.msra.mxu0 0.0
  %336 = vmatprep.subr.mxu0 0.0
  %337 = vmatpush1.msra.mxu0 0.0
  %338 = vmatprep.subr.mxu0 0.0
  %339 = vmatpush1.msra.mxu0 0.0
  %340 = vmatprep.mubr.f32.mxu0 0.0
  %341 = vmatmul.mubr.f32.gmra.mrb[0].mxu0 %v258
  %v342 = vpop.f32.mrb[0].mxu0
  %v343 = vadd.f32 0.0, %v342
  %v344 = vpop.f32.mrb[0].mxu0
  %345 = vmatprep.mubr.f32.mxu0 0.0
  %346 = vmatmul.mubr.f32.gmra.mrb[0].mxu0 %v259
  %v347 = vpop.f32.mrb[0].mxu0
  %v348 = vadd.f32 0.0, %v347
  %v349 = vpop.f32.mrb[0].mxu0
  %350 = vdwg.mxu0
  %v351 = vld [vmem:[%s6] sm:$0xff]
  %v352 = vld [vmem:[%s6 + $0x8] sm:$0xff]
  %v353 = vld [vmem:[%s6 + $0x10] sm:$0xff]
  %v354 = vld [vmem:[%s6 + $0x18] sm:$0xff]
  %v355 = vld [vmem:[%s6 + $0x20] sm:$0xff]
  %v356 = vld [vmem:[%s6 + $0x28] sm:$0xff]
  %v357 = vld [vmem:[%s6 + $0x30] sm:$0xff]
  %v358 = vld [vmem:[%s6 + $0x38] sm:$0xff]
  %v359 = vld [vmem:[%s6 + $0x40] sm:$0xff]
  %v360 = vld [vmem:[%s6 + $0x48] sm:$0xff]
  %v361 = vld [vmem:[%s6 + $0x50] sm:$0xff]
  %v362 = vld [vmem:[%s6 + $0x58] sm:$0xff]
  %v363 = vld [vmem:[%s6 + $0x60] sm:$0xff]
  %v364 = vld [vmem:[%s6 + $0x68] sm:$0xff]
  %v365 = vld [vmem:[%s6 + $0x70] sm:$0xff]
  %v366 = vld [vmem:[%s6 + $0x78] sm:$0xff]
  %v367 = vld [vmem:[%s7] sm:$0x1]
  %v369 = vlaneseq
  %v370 = vshrl.u32 %v369, 7
  %v371 = vsub.s32 0, %v370
  %v372 = vrot.slane %v367, %v371
  %374 = vmatprep.subr.mxu0 0.0
  %375 = vmatpush1.msra.mxu0 %v351
  %376 = vmatprep.subr.mxu0 0.0
  %377 = vmatpush1.msra.mxu0 %v352
  %378 = vmatprep.subr.mxu0 0.0
  %379 = vmatpush1.msra.mxu0 %v353
  %380 = vmatprep.subr.mxu0 0.0
  %381 = vmatpush1.msra.mxu0 %v354
  %382 = vmatprep.subr.mxu0 0.0
  %383 = vmatpush1.msra.mxu0 %v355
  %384 = vmatprep.subr.mxu0 0.0
  %385 = vmatpush1.msra.mxu0 %v356
  %386 = vmatprep.subr.mxu0 0.0
  %387 = vmatpush1.msra.mxu0 %v357
  %388 = vmatprep.subr.mxu0 0.0
  %389 = vmatpush1.msra.mxu0 %v358
  %390 = vmatprep.subr.mxu0 0.0
  %391 = vmatpush1.msra.mxu0 %v359
  %392 = vmatprep.subr.mxu0 0.0
  %393 = vmatpush1.msra.mxu0 %v360
  %394 = vmatprep.subr.mxu0 0.0
  %395 = vmatpush1.msra.mxu0 %v361
  %396 = vmatprep.subr.mxu0 0.0
  %397 = vmatpush1.msra.mxu0 %v362
  %398 = vmatprep.subr.mxu0 0.0
  %399 = vmatpush1.msra.mxu0 %v363
  %400 = vmatprep.subr.mxu0 0.0
  %401 = vmatpush1.msra.mxu0 %v364
  %402 = vmatprep.subr.mxu0 0.0
  %403 = vmatpush1.msra.mxu0 %v365
  %404 = vmatprep.subr.mxu0 0.0
  %405 = vmatpush1.msra.mxu0 %v366
  %406 = vmatprep.subr.mxu0 0.0
  %407 = vmatpush1.msra.mxu0 0.0
  %408 = vmatprep.subr.mxu0 0.0
  %409 = vmatpush1.msra.mxu0 0.0
  %410 = vmatprep.subr.mxu0 0.0
  %411 = vmatpush1.msra.mxu0 0.0
  %412 = vmatprep.subr.mxu0 0.0
  %413 = vmatpush1.msra.mxu0 0.0
  %414 = vmatprep.subr.mxu0 0.0
  %415 = vmatpush1.msra.mxu0 0.0
  %416 = vmatprep.subr.mxu0 0.0
  %417 = vmatpush1.msra.mxu0 0.0
  %418 = vmatprep.subr.mxu0 0.0
  %419 = vmatpush1.msra.mxu0 0.0
  %420 = vmatprep.subr.mxu0 0.0
  %421 = vmatpush1.msra.mxu0 0.0
  %422 = vmatprep.subr.mxu0 0.0
  %423 = vmatpush1.msra.mxu0 0.0
  %424 = vmatprep.subr.mxu0 0.0
  %425 = vmatpush1.msra.mxu0 0.0
  %426 = vmatprep.subr.mxu0 0.0
  %427 = vmatpush1.msra.mxu0 0.0
  %428 = vmatprep.subr.mxu0 0.0
  %429 = vmatpush1.msra.mxu0 0.0
  %430 = vmatprep.subr.mxu0 0.0
  %431 = vmatpush1.msra.mxu0 0.0
  %432 = vmatprep.subr.mxu0 0.0
  %433 = vmatpush1.msra.mxu0 0.0
  %434 = vmatprep.subr.mxu0 0.0
  %435 = vmatpush1.msra.mxu0 0.0
  %436 = vmatprep.subr.mxu0 0.0
  %437 = vmatpush1.msra.mxu0 0.0
  %438 = vmatprep.mubr.f32.mxu0 0.0
  %439 = vmatmul.mubr.f32.gmra.mrb[0].mxu0 %v343
  %v440 = vpop.f32.mrb[0].mxu0
  %v441 = vadd.f32 %v372, %v440
  %v442 = vpop.f32.mrb[0].mxu0
  %443 = vmatprep.mubr.f32.mxu0 0.0
  %444 = vmatmul.mubr.f32.gmra.mrb[0].mxu0 %v348
  %v445 = vpop.f32.mrb[0].mxu0
  %v446 = vadd.f32 %v372, %v445
  %v447 = vpop.f32.mrb[0].mxu0
  %448 = vdwg.mxu0
  %v449 = vmax.f32 %v441, 0.0
  %v450 = vmax.f32 %v446, 0.0
  %v451 = vld [vmem:[%s8] sm:$0xff]
  %v452 = vld [vmem:[%s8 + $0x8] sm:$0xff]
  %v453 = vld [vmem:[%s8 + $0x10] sm:$0xff]
  %v454 = vld [vmem:[%s8 + $0x18] sm:$0xff]
  %v455 = vld [vmem:[%s8 + $0x20] sm:$0xff]
  %v456 = vld [vmem:[%s8 + $0x28] sm:$0xff]
  %v457 = vld [vmem:[%s8 + $0x30] sm:$0xff]
  %v458 = vld [vmem:[%s8 + $0x38] sm:$0xff]
  %v459 = vld [vmem:[%s9] sm:$0x1]
  %v461 = vlaneseq
  %v462 = vshrl.u32 %v461, 7
  %v463 = vsub.s32 0, %v462
  %v464 = vrot.slane %v459, %v463
  %v467 = vsel %vm176, %v449, 0
  %v470 = vsel %vm176, %v450, 0
  %472 = vmatprep.subr.mxu0 0.0
  %473 = vmatpush1.msra.mxu0 %v451
  %474 = vmatprep.subr.mxu0 0.0
  %475 = vmatpush1.msra.mxu0 %v452
  %476 = vmatprep.subr.mxu0 0.0
  %477 = vmatpush1.msra.mxu0 %v453
  %478 = vmatprep.subr.mxu0 0.0
  %479 = vmatpush1.msra.mxu0 %v454
  %480 = vmatprep.subr.mxu0 0.0
  %481 = vmatpush1.msra.mxu0 %v455
  %482 = vmatprep.subr.mxu0 0.0
  %483 = vmatpush1.msra.mxu0 %v456
  %484 = vmatprep.subr.mxu0 0.0
  %485 = vmatpush1.msra.mxu0 %v457
  %486 = vmatprep.subr.mxu0 0.0
  %487 = vmatpush1.msra.mxu0 %v458
  %488 = vmatprep.subr.mxu0 0.0
  %489 = vmatpush1.msra.mxu0 0.0
  %490 = vmatprep.subr.mxu0 0.0
  %491 = vmatpush1.msra.mxu0 0.0
  %492 = vmatprep.subr.mxu0 0.0
  %493 = vmatpush1.msra.mxu0 0.0
  %494 = vmatprep.subr.mxu0 0.0
  %495 = vmatpush1.msra.mxu0 0.0
  %496 = vmatprep.subr.mxu0 0.0
  %497 = vmatpush1.msra.mxu0 0.0
  %498 = vmatprep.subr.mxu0 0.0
  %499 = vmatpush1.msra.mxu0 0.0
  %500 = vmatprep.subr.mxu0 0.0
  %501 = vmatpush1.msra.mxu0 0.0
  %502 = vmatprep.subr.mxu0 0.0
  %503 = vmatpush1.msra.mxu0 0.0
  %504 = vmatprep.subr.mxu0 0.0
  %505 = vmatpush1.msra.mxu0 0.0
  %506 = vmatprep.subr.mxu0 0.0
  %507 = vmatpush1.msra.mxu0 0.0
  %508 = vmatprep.subr.mxu0 0.0
  %509 = vmatpush1.msra.mxu0 0.0
  %510 = vmatprep.subr.mxu0 0.0
  %511 = vmatpush1.msra.mxu0 0.0
  %512 = vmatprep.subr.mxu0 0.0
  %513 = vmatpush1.msra.mxu0 0.0
  %514 = vmatprep.subr.mxu0 0.0
  %515 = vmatpush1.msra.mxu0 0.0
  %516 = vmatprep.subr.mxu0 0.0
  %517 = vmatpush1.msra.mxu0 0.0
  %518 = vmatprep.subr.mxu0 0.0
  %519 = vmatpush1.msra.mxu0 0.0
  %520 = vmatprep.subr.mxu0 0.0
  %521 = vmatpush1.msra.mxu0 0.0
  %522 = vmatprep.subr.mxu0 0.0
  %523 = vmatpush1.msra.mxu0 0.0
  %524 = vmatprep.subr.mxu0 0.0
  %525 = vmatpush1.msra.mxu0 0.0
  %526 = vmatprep.subr.mxu0 0.0
  %527 = vmatpush1.msra.mxu0 0.0
  %528 = vmatprep.subr.mxu0 0.0
  %529 = vmatpush1.msra.mxu0 0.0
  %530 = vmatprep.subr.mxu0 0.0
  %531 = vmatpush1.msra.mxu0 0.0
  %532 = vmatprep.subr.mxu0 0.0
  %533 = vmatpush1.msra.mxu0 0.0
  %534 = vmatprep.subr.mxu0 0.0
  %535 = vmatpush1.msra.mxu0 0.0
  %536 = vmatprep.mubr.f32.mxu0 0.0
  %537 = vmatmul.mubr.f32.gmra.mrb[0].mxu0 %v467
  %v538 = vpop.f32.mrb[0].mxu0
  %v539 = vadd.f32 %v464, %v538
  %v540 = vpop.f32.mrb[0].mxu0
  %541 = vmatprep.mubr.f32.mxu0 0.0
  %542 = vmatmul.mubr.f32.gmra.mrb[0].mxu0 %v470
  %v543 = vpop.f32.mrb[0].mxu0
  %v544 = vadd.f32 %v464, %v543
  %v545 = vpop.f32.mrb[0].mxu0
  %546 = vdwg.mxu0
  %v547 = vld [vmem:[%s10] sm:$0xff]
  %v548 = vld [vmem:[%s10 + $0x8] sm:$0xff]
  %v549 = vld [vmem:[%s10 + $0x10] sm:$0xff]
  %v550 = vld [vmem:[%s10 + $0x18] sm:$0xf]
  %v551 = vld [vmem:[%s10 + $0x20] sm:$0xf]
  %v552 = vld [vmem:[%s10 + $0x28] sm:$0xf]
  %v553 = vld [vmem:[%s11] sm:$0xff]
  %v554 = vld [vmem:[%s11 + $0x8] sm:$0xff]
  %v555 = vld [vmem:[%s11 + $0x10] sm:$0xff]
  %v556 = vld [vmem:[%s11 + $0x18] sm:$0xff]
  %v557 = vld [vmem:[%s11 + $0x20] sm:$0xff]
  %v558 = vld [vmem:[%s11 + $0x28] sm:$0xff]
  %v559 = vld [vmem:[%s11 + $0x30] sm:$0xff]
  %v560 = vld [vmem:[%s11 + $0x38] sm:$0xff]
  %v561 = vld [vmem:[%s11 + $0x40] sm:$0xff]
  %v562 = vld [vmem:[%s11 + $0x48] sm:$0xff]
  %v563 = vld [vmem:[%s11 + $0x50] sm:$0xff]
  %v564 = vld [vmem:[%s11 + $0x58] sm:$0xff]
  %v565 = vld [vmem:[%s11 + $0x60] sm:$0xff]
  %v566 = vld [vmem:[%s11 + $0x68] sm:$0xff]
  %v567 = vld [vmem:[%s11 + $0x70] sm:$0xff]
  %v568 = vld [vmem:[%s11 + $0x78] sm:$0xff]
  %v569 = vld [vmem:[%s11 + $0x80] sm:$0xff]
  %v570 = vld [vmem:[%s11 + $0x88] sm:$0xff]
  %v571 = vld [vmem:[%s11 + $0x90] sm:$0xff]
  %v572 = vld [vmem:[%s11 + $0x98] sm:$0xff]
  %v573 = vld [vmem:[%s11 + $0xa0] sm:$0xff]
  %v574 = vld [vmem:[%s11 + $0xa8] sm:$0xff]
  %v575 = vld [vmem:[%s11 + $0xb0] sm:$0xff]
  %v576 = vld [vmem:[%s11 + $0xb8] sm:$0xff]
  %v577 = vld [vmem:[%s12] sm:$0x7]
  %v578 = vld [vmem:[%s13] sm:$0x7]
  %v580 = vsel %vm176, %v539, 0
  %v583 = vsel %vm176, %v544, 0
  %585 = vmatprep.subr.mxu0 %v554
  %586 = vmatpush1.msra.mxu0 %v553
  %587 = vmatprep.subr.mxu0 %v557
  %588 = vmatpush1.msra.mxu0 %v556
  %589 = vmatprep.subr.mxu0 %v560
  %590 = vmatpush1.msra.mxu0 %v559
  %591 = vmatprep.subr.mxu0 %v563
  %592 = vmatpush1.msra.mxu0 %v562
  %593 = vmatprep.subr.mxu0 %v566
  %594 = vmatpush1.msra.mxu0 %v565
  %595 = vmatprep.subr.mxu0 %v569
  %596 = vmatpush1.msra.mxu0 %v568
  %597 = vmatprep.subr.mxu0 %v572
  %598 = vmatpush1.msra.mxu0 %v571
  %599 = vmatprep.subr.mxu0 %v575
  %600 = vmatpush1.msra.mxu0 %v574
  %601 = vmatprep.subr.mxu0 0.0
  %602 = vmatpush1.msra.mxu0 0.0
  %603 = vmatprep.subr.mxu0 0.0
  %604 = vmatpush1.msra.mxu0 0.0
  %605 = vmatprep.subr.mxu0 0.0
  %606 = vmatpush1.msra.mxu0 0.0
  %607 = vmatprep.subr.mxu0 0.0
  %608 = vmatpush1.msra.mxu0 0.0
  %609 = vmatprep.subr.mxu0 0.0
  %610 = vmatpush1.msra.mxu0 0.0
  %611 = vmatprep.subr.mxu0 0.0
  %612 = vmatpush1.msra.mxu0 0.0
  %613 = vmatprep.subr.mxu0 0.0
  %614 = vmatpush1.msra.mxu0 0.0
  %615 = vmatprep.subr.mxu0 0.0
  %616 = vmatpush1.msra.mxu0 0.0
  %617 = vmatprep.subr.mxu0 0.0
  %618 = vmatpush1.msra.mxu0 0.0
  %619 = vmatprep.subr.mxu0 0.0
  %620 = vmatpush1.msra.mxu0 0.0
  %621 = vmatprep.subr.mxu0 0.0
  %622 = vmatpush1.msra.mxu0 0.0
  %623 = vmatprep.subr.mxu0 0.0
  %624 = vmatpush1.msra.mxu0 0.0
  %625 = vmatprep.subr.mxu0 0.0
  %626 = vmatpush1.msra.mxu0 0.0
  %627 = vmatprep.subr.mxu0 0.0
  %628 = vmatpush1.msra.mxu0 0.0
  %629 = vmatprep.subr.mxu0 0.0
  %630 = vmatpush1.msra.mxu0 0.0
  %631 = vmatprep.subr.mxu0 0.0
  %632 = vmatpush1.msra.mxu0 0.0
  %633 = vmatprep.subr.mxu0 0.0
  %634 = vmatpush1.msra.mxu0 0.0
  %635 = vmatprep.subr.mxu0 0.0
  %636 = vmatpush1.msra.mxu0 0.0
  %637 = vmatprep.subr.mxu0 0.0
  %638 = vmatpush1.msra.mxu0 0.0
  %639 = vmatprep.subr.mxu0 0.0
  %640 = vmatpush1.msra.mxu0 0.0
  %641 = vmatprep.subr.mxu0 0.0
  %642 = vmatpush1.msra.mxu0 0.0
  %643 = vmatprep.subr.mxu0 0.0
  %644 = vmatpush1.msra.mxu0 0.0
  %645 = vmatprep.subr.mxu0 0.0
  %646 = vmatpush1.msra.mxu0 0.0
  %647 = vmatprep.subr.mxu0 0.0
  %648 = vmatpush1.msra.mxu0 0.0
  %649 = vmatprep.mubr.f32.mxu0 0.0
  %650 = vmatmul.mubr.f32.gmra.mrb[0].mxu0 %v580
  %v651 = vpop.f32.mrb[0].mxu0
  %v652 = vadd.f32 0.0, %v651
  %v653 = vpop.f32.mrb[0].mxu0
  %v654 = vadd.f32 0.0, %v653
  %655 = vmatprep.mubr.f32.mxu0 0.0
  %656 = vmatmul.mubr.f32.gmra.mrb[0].mxu0 %v583
  %v657 = vpop.f32.mrb[0].mxu0
  %v658 = vadd.f32 0.0, %v657
  %v659 = vpop.f32.mrb[0].mxu0
  %v660 = vadd.f32 0.0, %v659
  %661 = vdwg.mxu0
  %662 = vmatprep.subr.mxu0 0.0
  %663 = vmatpush1.msra.mxu0 %v555
  %664 = vmatprep.subr.mxu0 0.0
  %665 = vmatpush1.msra.mxu0 %v558
  %666 = vmatprep.subr.mxu0 0.0
  %667 = vmatpush1.msra.mxu0 %v561
  %668 = vmatprep.subr.mxu0 0.0
  %669 = vmatpush1.msra.mxu0 %v564
  %670 = vmatprep.subr.mxu0 0.0
  %671 = vmatpush1.msra.mxu0 %v567
  %672 = vmatprep.subr.mxu0 0.0
  %673 = vmatpush1.msra.mxu0 %v570
  %674 = vmatprep.subr.mxu0 0.0
  %675 = vmatpush1.msra.mxu0 %v573
  %676 = vmatprep.subr.mxu0 0.0
  %677 = vmatpush1.msra.mxu0 %v576
  %678 = vmatprep.subr.mxu0 0.0
  %679 = vmatpush1.msra.mxu0 0.0
  %680 = vmatprep.subr.mxu0 0.0
  %681 = vmatpush1.msra.mxu0 0.0
  %682 = vmatprep.subr.mxu0 0.0
  %683 = vmatpush1.msra.mxu0 0.0
  %684 = vmatprep.subr.mxu0 0.0
  %685 = vmatpush1.msra.mxu0 0.0
  %686 = vmatprep.subr.mxu0 0.0
  %687 = vmatpush1.msra.mxu0 0.0
  %688 = vmatprep.subr.mxu0 0.0
  %689 = vmatpush1.msra.mxu0 0.0
  %690 = vmatprep.subr.mxu0 0.0
  %691 = vmatpush1.msra.mxu0 0.0
  %692 = vmatprep.subr.mxu0 0.0
  %693 = vmatpush1.msra.mxu0 0.0
  %694 = vmatprep.subr.mxu0 0.0
  %695 = vmatpush1.msra.mxu0 0.0
  %696 = vmatprep.subr.mxu0 0.0
  %697 = vmatpush1.msra.mxu0 0.0
  %698 = vmatprep.subr.mxu0 0.0
  %699 = vmatpush1.msra.mxu0 0.0
  %700 = vmatprep.subr.mxu0 0.0
  %701 = vmatpush1.msra.mxu0 0.0
  %702 = vmatprep.subr.mxu0 0.0
  %703 = vmatpush1.msra.mxu0 0.0
  %704 = vmatprep.subr.mxu0 0.0
  %705 = vmatpush1.msra.mxu0 0.0
  %706 = vmatprep.subr.mxu0 0.0
  %707 = vmatpush1.msra.mxu0 0.0
  %708 = vmatprep.subr.mxu0 0.0
  %709 = vmatpush1.msra.mxu0 0.0
  %710 = vmatprep.subr.mxu0 0.0
  %711 = vmatpush1.msra.mxu0 0.0
  %712 = vmatprep.subr.mxu0 0.0
  %713 = vmatpush1.msra.mxu0 0.0
  %714 = vmatprep.subr.mxu0 0.0
  %715 = vmatpush1.msra.mxu0 0.0
  %716 = vmatprep.subr.mxu0 0.0
  %717 = vmatpush1.msra.mxu0 0.0
  %718 = vmatprep.subr.mxu0 0.0
  %719 = vmatpush1.msra.mxu0 0.0
  %720 = vmatprep.subr.mxu0 0.0
  %721 = vmatpush1.msra.mxu0 0.0
  %722 = vmatprep.subr.mxu0 0.0
  %723 = vmatpush1.msra.mxu0 0.0
  %724 = vmatprep.subr.mxu0 0.0
  %725 = vmatpush1.msra.mxu0 0.0
  %726 = vmatprep.mubr.f32.mxu0 0.0
  %727 = vmatmul.mubr.f32.gmra.mrb[0].mxu0 %v580
  %v728 = vpop.f32.mrb[0].mxu0
  %v729 = vadd.f32 0.0, %v728
  %v730 = vpop.f32.mrb[0].mxu0
  %731 = vmatprep.mubr.f32.mxu0 0.0
  %732 = vmatmul.mubr.f32.gmra.mrb[0].mxu0 %v583
  %v733 = vpop.f32.mrb[0].mxu0
  %v734 = vadd.f32 0.0, %v733
  %v735 = vpop.f32.mrb[0].mxu0
  %736 = vdwg.mxu0
  %v738 = vsel %vm80, %v550, 0
  %v741 = vsel %vm80, %v551, 0
  %v744 = vsel %vm80, %v552, 0
  %746 = vmatprep.subr.mxu0 %v548
  %747 = vmatpush1.msra.mxu0 %v547
  %748 = vmatprep.subr.mxu0 %v741
  %749 = vmatpush1.msra.mxu0 %v738
  %750 = vmatprep.subr.mxu0 0.0
  %751 = vmatpush1.msra.mxu0 0.0
  %752 = vmatprep.subr.mxu0 0.0
  %753 = vmatpush1.msra.mxu0 0.0
  %754 = vmatprep.subr.mxu0 0.0
  %755 = vmatpush1.msra.mxu0 0.0
  %756 = vmatprep.subr.mxu0 0.0
  %757 = vmatpush1.msra.mxu0 0.0
  %758 = vmatprep.subr.mxu0 0.0
  %759 = vmatpush1.msra.mxu0 0.0
  %760 = vmatprep.subr.mxu0 0.0
  %761 = vmatpush1.msra.mxu0 0.0
  %762 = vmatprep.subr.mxu0 0.0
  %763 = vmatpush1.msra.mxu0 0.0
  %764 = vmatprep.subr.mxu0 0.0
  %765 = vmatpush1.msra.mxu0 0.0
  %766 = vmatprep.subr.mxu0 0.0
  %767 = vmatpush1.msra.mxu0 0.0
  %768 = vmatprep.subr.mxu0 0.0
  %769 = vmatpush1.msra.mxu0 0.0
  %770 = vmatprep.subr.mxu0 0.0
  %771 = vmatpush1.msra.mxu0 0.0
  %772 = vmatprep.subr.mxu0 0.0
  %773 = vmatpush1.msra.mxu0 0.0
  %774 = vmatprep.subr.mxu0 0.0
  %775 = vmatpush1.msra.mxu0 0.0
  %776 = vmatprep.subr.mxu0 0.0
  %777 = vmatpush1.msra.mxu0 0.0
  %778 = vmatprep.subr.mxu0 0.0
  %779 = vmatpush1.msra.mxu0 0.0
  %780 = vmatprep.subr.mxu0 0.0
  %781 = vmatpush1.msra.mxu0 0.0
  %782 = vmatprep.subr.mxu0 0.0
  %783 = vmatpush1.msra.mxu0 0.0
  %784 = vmatprep.subr.mxu0 0.0
  %785 = vmatpush1.msra.mxu0 0.0
  %786 = vmatprep.subr.mxu0 0.0
  %787 = vmatpush1.msra.mxu0 0.0
  %788 = vmatprep.subr.mxu0 0.0
  %789 = vmatpush1.msra.mxu0 0.0
  %790 = vmatprep.subr.mxu0 0.0
  %791 = vmatpush1.msra.mxu0 0.0
  %792 = vmatprep.subr.mxu0 0.0
  %793 = vmatpush1.msra.mxu0 0.0
  %794 = vmatprep.subr.mxu0 0.0
  %795 = vmatpush1.msra.mxu0 0.0
  %796 = vmatprep.subr.mxu0 0.0
  %797 = vmatpush1.msra.mxu0 0.0
  %798 = vmatprep.subr.mxu0 0.0
  %799 = vmatpush1.msra.mxu0 0.0
  %800 = vmatprep.subr.mxu0 0.0
  %801 = vmatpush1.msra.mxu0 0.0
  %802 = vmatprep.subr.mxu0 0.0
  %803 = vmatpush1.msra.mxu0 0.0
  %804 = vmatprep.subr.mxu0 0.0
  %805 = vmatpush1.msra.mxu0 0.0
  %806 = vmatprep.subr.mxu0 0.0
  %807 = vmatpush1.msra.mxu0 0.0
  %808 = vmatprep.subr.mxu0 0.0
  %809 = vmatpush1.msra.mxu0 0.0
  %810 = vmatprep.mubr.f32.mxu0 0.0
  %811 = vmatmul.mubr.f32.gmra.mrb[0].mxu0 %v75
  %v812 = vpop.f32.mrb[0].mxu0
  %v813 = vadd.f32 %v652, %v812
  %v814 = vpop.f32.mrb[0].mxu0
  %v815 = vadd.f32 %v654, %v814
  %816 = vmatprep.mubr.f32.mxu0 0.0
  %817 = vmatmul.mubr.f32.gmra.mrb[0].mxu0 %v78
  %v818 = vpop.f32.mrb[0].mxu0
  %v819 = vadd.f32 %v658, %v818
  %v820 = vpop.f32.mrb[0].mxu0
  %v821 = vadd.f32 %v660, %v820
  %822 = vdwg.mxu0
  %823 = vmatprep.subr.mxu0 0.0
  %824 = vmatpush1.msra.mxu0 %v549
  %825 = vmatprep.subr.mxu0 0.0
  %826 = vmatpush1.msra.mxu0 %v744
  %827 = vmatprep.subr.mxu0 0.0
  %828 = vmatpush1.msra.mxu0 0.0
  %829 = vmatprep.subr.mxu0 0.0
  %830 = vmatpush1.msra.mxu0 0.0
  %831 = vmatprep.subr.mxu0 0.0
  %832 = vmatpush1.msra.mxu0 0.0
  %833 = vmatprep.subr.mxu0 0.0
  %834 = vmatpush1.msra.mxu0 0.0
  %835 = vmatprep.subr.mxu0 0.0
  %836 = vmatpush1.msra.mxu0 0.0
  %837 = vmatprep.subr.mxu0 0.0
  %838 = vmatpush1.msra.mxu0 0.0
  %839 = vmatprep.subr.mxu0 0.0
  %840 = vmatpush1.msra.mxu0 0.0
  %841 = vmatprep.subr.mxu0 0.0
  %842 = vmatpush1.msra.mxu0 0.0
  %843 = vmatprep.subr.mxu0 0.0
  %844 = vmatpush1.msra.mxu0 0.0
  %845 = vmatprep.subr.mxu0 0.0
  %846 = vmatpush1.msra.mxu0 0.0
  %847 = vmatprep.subr.mxu0 0.0
  %848 = vmatpush1.msra.mxu0 0.0
  %849 = vmatprep.subr.mxu0 0.0
  %850 = vmatpush1.msra.mxu0 0.0
  %851 = vmatprep.subr.mxu0 0.0
  %852 = vmatpush1.msra.mxu0 0.0
  %853 = vmatprep.subr.mxu0 0.0
  %854 = vmatpush1.msra.mxu0 0.0
  %855 = vmatprep.subr.mxu0 0.0
  %856 = vmatpush1.msra.mxu0 0.0
  %857 = vmatprep.subr.mxu0 0.0
  %858 = vmatpush1.msra.mxu0 0.0
  %859 = vmatprep.subr.mxu0 0.0
  %860 = vmatpush1.msra.mxu0 0.0
  %861 = vmatprep.subr.mxu0 0.0
  %862 = vmatpush1.msra.mxu0 0.0
  %863 = vmatprep.subr.mxu0 0.0
  %864 = vmatpush1.msra.mxu0 0.0
  %865 = vmatprep.subr.mxu0 0.0
  %866 = vmatpush1.msra.mxu0 0.0
  %867 = vmatprep.subr.mxu0 0.0
  %868 = vmatpush1.msra.mxu0 0.0
  %869 = vmatprep.subr.mxu0 0.0
  %870 = vmatpush1.msra.mxu0 0.0
  %871 = vmatprep.subr.mxu0 0.0
  %872 = vmatpush1.msra.mxu0 0.0
  %873 = vmatprep.subr.mxu0 0.0
  %874 = vmatpush1.msra.mxu0 0.0
  %875 = vmatprep.subr.mxu0 0.0
  %876 = vmatpush1.msra.mxu0 0.0
  %877 = vmatprep.subr.mxu0 0.0
  %878 = vmatpush1.msra.mxu0 0.0
  %879 = vmatprep.subr.mxu0 0.0
  %880 = vmatpush1.msra.mxu0 0.0
  %881 = vmatprep.subr.mxu0 0.0
  %882 = vmatpush1.msra.mxu0 0.0
  %883 = vmatprep.subr.mxu0 0.0
  %884 = vmatpush1.msra.mxu0 0.0
  %885 = vmatprep.subr.mxu0 0.0
  %886 = vmatpush1.msra.mxu0 0.0
  %887 = vmatprep.mubr.f32.mxu0 0.0
  %888 = vmatmul.mubr.f32.gmra.mrb[0].mxu0 %v75
  %v889 = vpop.f32.mrb[0].mxu0
  %v890 = vadd.f32 %v729, %v889
  %v891 = vpop.f32.mrb[0].mxu0
  %892 = vmatprep.mubr.f32.mxu0 0.0
  %893 = vmatmul.mubr.f32.gmra.mrb[0].mxu0 %v78
  %v894 = vpop.f32.mrb[0].mxu0
  %v895 = vadd.f32 %v734, %v894
  %v896 = vpop.f32.mrb[0].mxu0
  %897 = vdwg.mxu0
  %v899 = vlaneseq
  %v900 = vshrl.u32 %v899, 7
  %v901 = vsub.s32 0, %v900
  %v902 = vrot.slane %v577, %v901
  %v903 = vlaneseq
  %v904 = vshrl.u32 %v903, 7
  %v905 = vsub.s32 1, %v904
  %v906 = vrot.slane %v577, %v905
  %v907 = vlaneseq
  %v908 = vshrl.u32 %v907, 7
  %v909 = vsub.s32 2, %v908
  %v910 = vrot.slane %v577, %v909
  %v914 = vadd.f32 %v813, %v902
  %v915 = vadd.f32 %v815, %v906
  %v916 = vadd.f32 %v890, %v910
  %v917 = vadd.f32 %v819, %v902
  %v918 = vadd.f32 %v821, %v906
  %v919 = vadd.f32 %v895, %v910
  %v920 = vmax.f32 %v914, 0.0
  %v921 = vmax.f32 %v915, 0.0
  %v922 = vmax.f32 %v916, 0.0
  %v923 = vmax.f32 %v917, 0.0
  %v924 = vmax.f32 %v918, 0.0
  %v925 = vmax.f32 %v919, 0.0
  %v926 = vmin.f32 %v920, 1.0
  %v927 = vmin.f32 %v921, 1.0
  %v928 = vmin.f32 %v922, 1.0
  %v929 = vmin.f32 %v923, 1.0
  %v930 = vmin.f32 %v924, 1.0
  %v931 = vmin.f32 %v925, 1.0
  %v932 = vmul.f32 %v926, 0.99
  %v933 = vmul.f32 %v927, 0.99
  %v934 = vmul.f32 %v928, 0.99
  %v935 = vmul.f32 %v929, 0.99
  %v936 = vmul.f32 %v930, 0.99
  %v937 = vmul.f32 %v931, 0.99
  %v938 = vmul.f32 %v914, 0.01
  %v939 = vmul.f32 %v915, 0.01
  %v940 = vmul.f32 %v916, 0.01
  %v941 = vmul.f32 %v917, 0.01
  %v942 = vmul.f32 %v918, 0.01
  %v943 = vmul.f32 %v919, 0.01
  %v944 = vadd.f32 %v932, %v938
  %v945 = vadd.f32 %v933, %v939
  %v946 = vadd.f32 %v934, %v940
  %v947 = vadd.f32 %v935, %v941
  %v948 = vadd.f32 %v936, %v942
  %v949 = vadd.f32 %v937, %v943
  %vm950 = vcmp.gt.f32.partialorder %v578, 0.0
  %v951 = vsel %vm950, 1, 0
  %v952 = vlaneseq
  %v953 = vshrl.u32 %v952, 7
  %v954 = vsub.s32 0, %v953
  %v955 = vrot.slane %v951, %v954
  %v956 = vlaneseq
  %v957 = vshrl.u32 %v956, 7
  %v958 = vsub.s32 1, %v957
  %v959 = vrot.slane %v951, %v958
  %v960 = vlaneseq
  %v961 = vshrl.u32 %v960, 7
  %v962 = vsub.s32 2, %v961
  %v963 = vrot.slane %v951, %v962
  %vm964 = vcmp.eq.s32.totalorder %v955, 1
  %vm965 = vcmp.eq.s32.totalorder %v959, 1
  %vm966 = vcmp.eq.s32.totalorder %v963, 1
  %v967 = vsel %vm964, %v944, %v920
  %v968 = vsel %vm965, %v945, %v921
  %v969 = vsel %vm966, %v946, %v922
  %v970 = vsel %vm964, %v947, %v923
  %v971 = vsel %vm965, %v948, %v924
  %v972 = vsel %vm966, %v949, %v925
  %v973 = vld [vmem:[%s14] sm:$0xff]
  %v974 = vld [vmem:[%s14 + $0x8] sm:$0xff]
  %v975 = vld [vmem:[%s14 + $0x10] sm:$0xff]
  %v976 = vld [vmem:[%s14 + $0x18] sm:$0xff]
  %v977 = vld [vmem:[%s14 + $0x20] sm:$0xff]
  %v978 = vld [vmem:[%s14 + $0x28] sm:$0xff]
  %v979 = vld [vmem:[%s14 + $0x30] sm:$0xff]
  %v980 = vld [vmem:[%s14 + $0x38] sm:$0xff]
  %v981 = vld [vmem:[%s14 + $0x40] sm:$0xff]
  %v982 = vld [vmem:[%s14 + $0x48] sm:$0xff]
  %v983 = vld [vmem:[%s14 + $0x50] sm:$0xff]
  %v984 = vld [vmem:[%s14 + $0x58] sm:$0xff]
  %v985 = vld [vmem:[%s14 + $0x60] sm:$0xff]
  %v986 = vld [vmem:[%s14 + $0x68] sm:$0xff]
  %v987 = vld [vmem:[%s14 + $0x70] sm:$0xff]
  %v988 = vld [vmem:[%s14 + $0x78] sm:$0xff]
  %v989 = vld [vmem:[%s14 + $0x80] sm:$0xff]
  %v990 = vld [vmem:[%s14 + $0x88] sm:$0xff]
  %v991 = vld [vmem:[%s14 + $0x90] sm:$0xff]
  %v992 = vld [vmem:[%s14 + $0x98] sm:$0xff]
  %v993 = vld [vmem:[%s14 + $0xa0] sm:$0xff]
  %v994 = vld [vmem:[%s14 + $0xa8] sm:$0xff]
  %v995 = vld [vmem:[%s14 + $0xb0] sm:$0xff]
  %v996 = vld [vmem:[%s14 + $0xb8] sm:$0xff]
  %v997 = vld [vmem:[%s14 + $0xc0] sm:$0xff]
  %v998 = vld [vmem:[%s14 + $0xc8] sm:$0xff]
  %v999 = vld [vmem:[%s14 + $0xd0] sm:$0xff]
  %v1000 = vld [vmem:[%s14 + $0xd8] sm:$0xff]
  %v1001 = vld [vmem:[%s14 + $0xe0] sm:$0xff]
  %v1002 = vld [vmem:[%s14 + $0xe8] sm:$0xff]
  %v1003 = vld [vmem:[%s14 + $0xf0] sm:$0xff]
  %v1004 = vld [vmem:[%s14 + $0xf8] sm:$0xff]
  %v1005 = vld [vmem:[%s14 + $0x100] sm:$0xff]
  %v1006 = vld [vmem:[%s14 + $0x108] sm:$0xff]
  %v1007 = vld [vmem:[%s14 + $0x110] sm:$0xff]
  %v1008 = vld [vmem:[%s14 + $0x118] sm:$0xff]
  %v1009 = vld [vmem:[%s14 + $0x120] sm:$0xff]
  %v1010 = vld [vmem:[%s14 + $0x128] sm:$0xff]
  %v1011 = vld [vmem:[%s14 + $0x130] sm:$0xff]
  %v1012 = vld [vmem:[%s14 + $0x138] sm:$0xff]
  %v1013 = vld [vmem:[%s14 + $0x140] sm:$0xff]
  %v1014 = vld [vmem:[%s14 + $0x148] sm:$0xff]
  %v1015 = vld [vmem:[%s14 + $0x150] sm:$0xff]
  %v1016 = vld [vmem:[%s14 + $0x158] sm:$0xff]
  %v1017 = vld [vmem:[%s14 + $0x160] sm:$0xff]
  %v1018 = vld [vmem:[%s14 + $0x168] sm:$0xff]
  %v1019 = vld [vmem:[%s14 + $0x170] sm:$0xff]
  %v1020 = vld [vmem:[%s14 + $0x178] sm:$0xff]
  %v1021 = vld [vmem:[%s14 + $0x180] sm:$0xff]
  %v1022 = vld [vmem:[%s14 + $0x188] sm:$0xff]
  %v1023 = vld [vmem:[%s14 + $0x190] sm:$0xff]
  %v1024 = vld [vmem:[%s14 + $0x198] sm:$0xff]
  %v1025 = vld [vmem:[%s14 + $0x1a0] sm:$0xff]
  %v1026 = vld [vmem:[%s14 + $0x1a8] sm:$0xff]
  %v1027 = vld [vmem:[%s14 + $0x1b0] sm:$0xff]
  %v1028 = vld [vmem:[%s14 + $0x1b8] sm:$0xff]
  %v1029 = vld [vmem:[%s14 + $0x1c0] sm:$0xff]
  %v1030 = vld [vmem:[%s14 + $0x1c8] sm:$0xff]
  %v1031 = vld [vmem:[%s14 + $0x1d0] sm:$0xff]
  %v1032 = vld [vmem:[%s14 + $0x1d8] sm:$0xff]
  %v1033 = vld [vmem:[%s14 + $0x1e0] sm:$0xff]
  %v1034 = vld [vmem:[%s14 + $0x1e8] sm:$0xff]
  %v1035 = vld [vmem:[%s14 + $0x1f0] sm:$0xff]
  %v1036 = vld [vmem:[%s14 + $0x1f8] sm:$0xff]
  %v1037 = vld [vmem:[%s14 + $0x200] sm:$0xff]
  %v1038 = vld [vmem:[%s14 + $0x208] sm:$0xff]
  %v1039 = vld [vmem:[%s14 + $0x210] sm:$0xff]
  %v1040 = vld [vmem:[%s14 + $0x218] sm:$0xff]
  %v1041 = vld [vmem:[%s14 + $0x220] sm:$0xff]
  %v1042 = vld [vmem:[%s14 + $0x228] sm:$0xff]
  %v1043 = vld [vmem:[%s14 + $0x230] sm:$0xff]
  %v1044 = vld [vmem:[%s14 + $0x238] sm:$0xff]
  %v1045 = vld [vmem:[%s14 + $0x240] sm:$0xff]
  %v1046 = vld [vmem:[%s14 + $0x248] sm:$0xff]
  %v1047 = vld [vmem:[%s14 + $0x250] sm:$0xff]
  %v1048 = vld [vmem:[%s14 + $0x258] sm:$0xff]
  %v1049 = vld [vmem:[%s14 + $0x260] sm:$0xff]
  %v1050 = vld [vmem:[%s14 + $0x268] sm:$0xff]
  %v1051 = vld [vmem:[%s14 + $0x270] sm:$0xff]
  %v1052 = vld [vmem:[%s14 + $0x278] sm:$0xff]
  %v1053 = vld [vmem:[%s14 + $0x280] sm:$0xff]
  %v1054 = vld [vmem:[%s14 + $0x288] sm:$0xff]
  %v1055 = vld [vmem:[%s14 + $0x290] sm:$0xff]
  %v1056 = vld [vmem:[%s14 + $0x298] sm:$0xff]
  %v1057 = vld [vmem:[%s14 + $0x2a0] sm:$0xff]
  %v1058 = vld [vmem:[%s14 + $0x2a8] sm:$0xff]
  %v1059 = vld [vmem:[%s14 + $0x2b0] sm:$0xff]
  %v1060 = vld [vmem:[%s14 + $0x2b8] sm:$0xff]
  %v1061 = vld [vmem:[%s14 + $0x2c0] sm:$0xff]
  %v1062 = vld [vmem:[%s14 + $0x2c8] sm:$0xff]
  %v1063 = vld [vmem:[%s14 + $0x2d0] sm:$0xff]
  %v1064 = vld [vmem:[%s14 + $0x2d8] sm:$0xff]
  %v1065 = vld [vmem:[%s14 + $0x2e0] sm:$0xff]
  %v1066 = vld [vmem:[%s14 + $0x2e8] sm:$0xff]
  %v1067 = vld [vmem:[%s14 + $0x2f0] sm:$0xff]
  %v1068 = vld [vmem:[%s14 + $0x2f8] sm:$0xff]
  %v1069 = vld [vmem:[%s15] sm:$0x3]
  %v1070 = vld [vmem:[%s16] sm:$0x3]
  %v1072 = vlaneseq
  %v1073 = vshrl.u32 %v1072, 7
  %v1074 = vsub.s32 0, %v1073
  %v1075 = vrot.slane %v1069, %v1074
  %v1076 = vlaneseq
  %v1077 = vshrl.u32 %v1076, 7
  %v1078 = vsub.s32 1, %v1077
  %v1079 = vrot.slane %v1069, %v1078
  %1082 = vmatprep.subr.mxu0 %v974
  %1083 = vmatpush1.msra.mxu0 %v973
  %1084 = vmatprep.subr.mxu0 %v976
  %1085 = vmatpush1.msra.mxu0 %v975
  %1086 = vmatprep.subr.mxu0 %v978
  %1087 = vmatpush1.msra.mxu0 %v977
  %1088 = vmatprep.subr.mxu0 %v980
  %1089 = vmatpush1.msra.mxu0 %v979
  %1090 = vmatprep.subr.mxu0 %v982
  %1091 = vmatpush1.msra.mxu0 %v981
  %1092 = vmatprep.subr.mxu0 %v984
  %1093 = vmatpush1.msra.mxu0 %v983
  %1094 = vmatprep.subr.mxu0 %v986
  %1095 = vmatpush1.msra.mxu0 %v985
  %1096 = vmatprep.subr.mxu0 %v988
  %1097 = vmatpush1.msra.mxu0 %v987
  %1098 = vmatprep.subr.mxu0 %v990
  %1099 = vmatpush1.msra.mxu0 %v989
  %1100 = vmatprep.subr.mxu0 %v992
  %1101 = vmatpush1.msra.mxu0 %v991
  %1102 = vmatprep.subr.mxu0 %v994
  %1103 = vmatpush1.msra.mxu0 %v993
  %1104 = vmatprep.subr.mxu0 %v996
  %1105 = vmatpush1.msra.mxu0 %v995
  %1106 = vmatprep.subr.mxu0 %v998
  %1107 = vmatpush1.msra.mxu0 %v997
  %1108 = vmatprep.subr.mxu0 %v1000
  %1109 = vmatpush1.msra.mxu0 %v999
  %1110 = vmatprep.subr.mxu0 %v1002
  %1111 = vmatpush1.msra.mxu0 %v1001
  %1112 = vmatprep.subr.mxu0 %v1004
  %1113 = vmatpush1.msra.mxu0 %v1003
  %1114 = vmatprep.subr.mxu0 %v1006
  %1115 = vmatpush1.msra.mxu0 %v1005
  %1116 = vmatprep.subr.mxu0 %v1008
  %1117 = vmatpush1.msra.mxu0 %v1007
  %1118 = vmatprep.subr.mxu0 %v1010
  %1119 = vmatpush1.msra.mxu0 %v1009
  %1120 = vmatprep.subr.mxu0 %v1012
  %1121 = vmatpush1.msra.mxu0 %v1011
  %1122 = vmatprep.subr.mxu0 %v1014
  %1123 = vmatpush1.msra.mxu0 %v1013
  %1124 = vmatprep.subr.mxu0 %v1016
  %1125 = vmatpush1.msra.mxu0 %v1015
  %1126 = vmatprep.subr.mxu0 %v1018
  %1127 = vmatpush1.msra.mxu0 %v1017
  %1128 = vmatprep.subr.mxu0 %v1020
  %1129 = vmatpush1.msra.mxu0 %v1019
  %1130 = vmatprep.subr.mxu0 %v1022
  %1131 = vmatpush1.msra.mxu0 %v1021
  %1132 = vmatprep.subr.mxu0 %v1024
  %1133 = vmatpush1.msra.mxu0 %v1023
  %1134 = vmatprep.subr.mxu0 %v1026
  %1135 = vmatpush1.msra.mxu0 %v1025
  %1136 = vmatprep.subr.mxu0 %v1028
  %1137 = vmatpush1.msra.mxu0 %v1027
  %1138 = vmatprep.subr.mxu0 %v1030
  %1139 = vmatpush1.msra.mxu0 %v1029
  %1140 = vmatprep.subr.mxu0 %v1032
  %1141 = vmatpush1.msra.mxu0 %v1031
  %1142 = vmatprep.subr.mxu0 %v1034
  %1143 = vmatpush1.msra.mxu0 %v1033
  %1144 = vmatprep.subr.mxu0 %v1036
  %1145 = vmatpush1.msra.mxu0 %v1035
  %1146 = vmatprep.mubr.f32.mxu0 %v968
  %1147 = vmatmul.mubr.f32.gmra.mrb[0].mxu0 %v967
  %v1148 = vpop.f32.mrb[0].mxu0
  %v1149 = vadd.f32 %v1075, %v1148
  %v1150 = vpop.f32.mrb[0].mxu0
  %v1151 = vadd.f32 %v1079, %v1150
  %1152 = vmatprep.mubr.f32.mxu0 %v971
  %1153 = vmatmul.mubr.f32.gmra.mrb[0].mxu0 %v970
  %v1154 = vpop.f32.mrb[0].mxu0
  %v1155 = vadd.f32 %v1075, %v1154
  %v1156 = vpop.f32.mrb[0].mxu0
  %v1157 = vadd.f32 %v1079, %v1156
  %1158 = vdwg.mxu0
  %1159 = vmatprep.subr.mxu0 %v1038
  %1160 = vmatpush1.msra.mxu0 %v1037
  %1161 = vmatprep.subr.mxu0 %v1040
  %1162 = vmatpush1.msra.mxu0 %v1039
  %1163 = vmatprep.subr.mxu0 %v1042
  %1164 = vmatpush1.msra.mxu0 %v1041
  %1165 = vmatprep.subr.mxu0 %v1044
  %1166 = vmatpush1.msra.mxu0 %v1043
  %1167 = vmatprep.subr.mxu0 %v1046
  %1168 = vmatpush1.msra.mxu0 %v1045
  %1169 = vmatprep.subr.mxu0 %v1048
  %1170 = vmatpush1.msra.mxu0 %v1047
  %1171 = vmatprep.subr.mxu0 %v1050
  %1172 = vmatpush1.msra.mxu0 %v1049
  %1173 = vmatprep.subr.mxu0 %v1052
  %1174 = vmatpush1.msra.mxu0 %v1051
  %1175 = vmatprep.subr.mxu0 %v1054
  %1176 = vmatpush1.msra.mxu0 %v1053
  %1177 = vmatprep.subr.mxu0 %v1056
  %1178 = vmatpush1.msra.mxu0 %v1055
  %1179 = vmatprep.subr.mxu0 %v1058
  %1180 = vmatpush1.msra.mxu0 %v1057
  %1181 = vmatprep.subr.mxu0 %v1060
  %1182 = vmatpush1.msra.mxu0 %v1059
  %1183 = vmatprep.subr.mxu0 %v1062
  %1184 = vmatpush1.msra.mxu0 %v1061
  %1185 = vmatprep.subr.mxu0 %v1064
  %1186 = vmatpush1.msra.mxu0 %v1063
  %1187 = vmatprep.subr.mxu0 %v1066
  %1188 = vmatpush1.msra.mxu0 %v1065
  %1189 = vmatprep.subr.mxu0 %v1068
  %1190 = vmatpush1.msra.mxu0 %v1067
  %1191 = vmatprep.subr.mxu0 0.0
  %1192 = vmatpush1.msra.mxu0 0.0
  %1193 = vmatprep.subr.mxu0 0.0
  %1194 = vmatpush1.msra.mxu0 0.0
  %1195 = vmatprep.subr.mxu0 0.0
  %1196 = vmatpush1.msra.mxu0 0.0
  %1197 = vmatprep.subr.mxu0 0.0
  %1198 = vmatpush1.msra.mxu0 0.0
  %1199 = vmatprep.subr.mxu0 0.0
  %1200 = vmatpush1.msra.mxu0 0.0
  %1201 = vmatprep.subr.mxu0 0.0
  %1202 = vmatpush1.msra.mxu0 0.0
  %1203 = vmatprep.subr.mxu0 0.0
  %1204 = vmatpush1.msra.mxu0 0.0
  %1205 = vmatprep.subr.mxu0 0.0
  %1206 = vmatpush1.msra.mxu0 0.0
  %1207 = vmatprep.subr.mxu0 0.0
  %1208 = vmatpush1.msra.mxu0 0.0
  %1209 = vmatprep.subr.mxu0 0.0
  %1210 = vmatpush1.msra.mxu0 0.0
  %1211 = vmatprep.subr.mxu0 0.0
  %1212 = vmatpush1.msra.mxu0 0.0
  %1213 = vmatprep.subr.mxu0 0.0
  %1214 = vmatpush1.msra.mxu0 0.0
  %1215 = vmatprep.subr.mxu0 0.0
  %1216 = vmatpush1.msra.mxu0 0.0
  %1217 = vmatprep.subr.mxu0 0.0
  %1218 = vmatpush1.msra.mxu0 0.0
  %1219 = vmatprep.subr.mxu0 0.0
  %1220 = vmatpush1.msra.mxu0 0.0
  %1221 = vmatprep.subr.mxu0 0.0
  %1222 = vmatpush1.msra.mxu0 0.0
  %1223 = vmatprep.mubr.f32.mxu0 0.0
  %1224 = vmatmul.mubr.f32.gmra.mrb[0].mxu0 %v969
  %v1225 = vpop.f32.mrb[0].mxu0
  %v1226 = vadd.f32 %v1149, %v1225
  %v1227 = vpop.f32.mrb[0].mxu0
  %v1228 = vadd.f32 %v1151, %v1227
  %1229 = vmatprep.mubr.f32.mxu0 0.0
  %1230 = vmatmul.mubr.f32.gmra.mrb[0].mxu0 %v972
  %v1231 = vpop.f32.mrb[0].mxu0
  %v1232 = vadd.f32 %v1155, %v1231
  %v1233 = vpop.f32.mrb[0].mxu0
  %v1234 = vadd.f32 %v1157, %v1233
  %1235 = vdwg.mxu0
  %v1236 = vmax.f32 %v1226, 0.0
  %v1237 = vmax.f32 %v1228, 0.0
  %v1238 = vmax.f32 %v1232, 0.0
  %v1239 = vmax.f32 %v1234, 0.0
  %v1240 = vmin.f32 %v1236, 1.0
  %v1241 = vmin.f32 %v1237, 1.0
  %v1242 = vmin.f32 %v1238, 1.0
  %v1243 = vmin.f32 %v1239, 1.0
  %v1244 = vmul.f32 %v1240, 0.99
  %v1245 = vmul.f32 %v1241, 0.99
  %v1246 = vmul.f32 %v1242, 0.99
  %v1247 = vmul.f32 %v1243, 0.99
  %v1248 = vmul.f32 %v1226, 0.01
  %v1249 = vmul.f32 %v1228, 0.01
  %v1250 = vmul.f32 %v1232, 0.01
  %v1251 = vmul.f32 %v1234, 0.01
  %v1252 = vadd.f32 %v1244, %v1248
  %v1253 = vadd.f32 %v1245, %v1249
  %v1254 = vadd.f32 %v1246, %v1250
  %v1255 = vadd.f32 %v1247, %v1251
  %vm1256 = vcmp.gt.f32.partialorder %v1070, 0.0
  %v1257 = vsel %vm1256, 1, 0
  %v1258 = vlaneseq
  %v1259 = vshrl.u32 %v1258, 7
  %v1260 = vsub.s32 0, %v1259
  %v1261 = vrot.slane %v1257, %v1260
  %v1262 = vlaneseq
  %v1263 = vshrl.u32 %v1262, 7
  %v1264 = vsub.s32 1, %v1263
  %v1265 = vrot.slane %v1257, %v1264
  %vm1266 = vcmp.eq.s32.totalorder %v1261, 1
  %vm1267 = vcmp.eq.s32.totalorder %v1265, 1
  %v1268 = vsel %vm1266, %v1252, %v1236
  %v1269 = vsel %vm1267, %v1253, %v1237
  %v1270 = vsel %vm1266, %v1254, %v1238
  %v1271 = vsel %vm1267, %v1255, %v1239
  %v1272 = vld [vmem:[%s17] sm:$0xff]
  %v1273 = vld [vmem:[%s17 + $0x8] sm:$0xff]
  %v1274 = vld [vmem:[%s17 + $0x10] sm:$0xff]
  %v1275 = vld [vmem:[%s17 + $0x18] sm:$0xff]
  %v1276 = vld [vmem:[%s17 + $0x20] sm:$0xff]
  %v1277 = vld [vmem:[%s17 + $0x28] sm:$0xff]
  %v1278 = vld [vmem:[%s17 + $0x30] sm:$0xff]
  %v1279 = vld [vmem:[%s17 + $0x38] sm:$0xff]
  %v1280 = vld [vmem:[%s17 + $0x40] sm:$0xff]
  %v1281 = vld [vmem:[%s17 + $0x48] sm:$0xff]
  %v1282 = vld [vmem:[%s17 + $0x50] sm:$0xff]
  %v1283 = vld [vmem:[%s17 + $0x58] sm:$0xff]
  %v1284 = vld [vmem:[%s17 + $0x60] sm:$0xff]
  %v1285 = vld [vmem:[%s17 + $0x68] sm:$0xff]
  %v1286 = vld [vmem:[%s17 + $0x70] sm:$0xff]
  %v1287 = vld [vmem:[%s17 + $0x78] sm:$0xff]
  %v1288 = vld [vmem:[%s17 + $0x80] sm:$0xff]
  %v1289 = vld [vmem:[%s17 + $0x88] sm:$0xff]
  %v1290 = vld [vmem:[%s17 + $0x90] sm:$0xff]
  %v1291 = vld [vmem:[%s17 + $0x98] sm:$0xff]
  %v1292 = vld [vmem:[%s17 + $0xa0] sm:$0xff]
  %v1293 = vld [vmem:[%s17 + $0xa8] sm:$0xff]
  %v1294 = vld [vmem:[%s17 + $0xb0] sm:$0xff]
  %v1295 = vld [vmem:[%s17 + $0xb8] sm:$0xff]
  %v1296 = vld [vmem:[%s18] sm:$0x1]
  %v1298 = vlaneseq
  %v1299 = vshrl.u32 %v1298, 7
  %v1300 = vsub.s32 0, %v1299
  %v1301 = vrot.slane %v1296, %v1300
  %v1304 = vsel %vm176, %v1269, 0
  %v1307 = vsel %vm176, %v1271, 0
  %1309 = vmatprep.subr.mxu0 0.0
  %1310 = vmatpush1.msra.mxu0 %v1272
  %1311 = vmatprep.subr.mxu0 0.0
  %1312 = vmatpush1.msra.mxu0 %v1273
  %1313 = vmatprep.subr.mxu0 0.0
  %1314 = vmatpush1.msra.mxu0 %v1274
  %1315 = vmatprep.subr.mxu0 0.0
  %1316 = vmatpush1.msra.mxu0 %v1275
  %1317 = vmatprep.subr.mxu0 0.0
  %1318 = vmatpush1.msra.mxu0 %v1276
  %1319 = vmatprep.subr.mxu0 0.0
  %1320 = vmatpush1.msra.mxu0 %v1277
  %1321 = vmatprep.subr.mxu0 0.0
  %1322 = vmatpush1.msra.mxu0 %v1278
  %1323 = vmatprep.subr.mxu0 0.0
  %1324 = vmatpush1.msra.mxu0 %v1279
  %1325 = vmatprep.subr.mxu0 0.0
  %1326 = vmatpush1.msra.mxu0 %v1280
  %1327 = vmatprep.subr.mxu0 0.0
  %1328 = vmatpush1.msra.mxu0 %v1281
  %1329 = vmatprep.subr.mxu0 0.0
  %1330 = vmatpush1.msra.mxu0 %v1282
  %1331 = vmatprep.subr.mxu0 0.0
  %1332 = vmatpush1.msra.mxu0 %v1283
  %1333 = vmatprep.subr.mxu0 0.0
  %1334 = vmatpush1.msra.mxu0 %v1284
  %1335 = vmatprep.subr.mxu0 0.0
  %1336 = vmatpush1.msra.mxu0 %v1285
  %1337 = vmatprep.subr.mxu0 0.0
  %1338 = vmatpush1.msra.mxu0 %v1286
  %1339 = vmatprep.subr.mxu0 0.0
  %1340 = vmatpush1.msra.mxu0 %v1287
  %1341 = vmatprep.subr.mxu0 0.0
  %1342 = vmatpush1.msra.mxu0 %v1288
  %1343 = vmatprep.subr.mxu0 0.0
  %1344 = vmatpush1.msra.mxu0 %v1289
  %1345 = vmatprep.subr.mxu0 0.0
  %1346 = vmatpush1.msra.mxu0 %v1290
  %1347 = vmatprep.subr.mxu0 0.0
  %1348 = vmatpush1.msra.mxu0 %v1291
  %1349 = vmatprep.subr.mxu0 0.0
  %1350 = vmatpush1.msra.mxu0 %v1292
  %1351 = vmatprep.subr.mxu0 0.0
  %1352 = vmatpush1.msra.mxu0 %v1293
  %1353 = vmatprep.subr.mxu0 0.0
  %1354 = vmatpush1.msra.mxu0 %v1294
  %1355 = vmatprep.subr.mxu0 0.0
  %1356 = vmatpush1.msra.mxu0 %v1295
  %1357 = vmatprep.subr.mxu0 0.0
  %1358 = vmatpush1.msra.mxu0 0.0
  %1359 = vmatprep.subr.mxu0 0.0
  %1360 = vmatpush1.msra.mxu0 0.0
  %1361 = vmatprep.subr.mxu0 0.0
  %1362 = vmatpush1.msra.mxu0 0.0
  %1363 = vmatprep.subr.mxu0 0.0
  %1364 = vmatpush1.msra.mxu0 0.0
  %1365 = vmatprep.subr.mxu0 0.0
  %1366 = vmatpush1.msra.mxu0 0.0
  %1367 = vmatprep.subr.mxu0 0.0
  %1368 = vmatpush1.msra.mxu0 0.0
  %1369 = vmatprep.subr.mxu0 0.0
  %1370 = vmatpush1.msra.mxu0 0.0
  %1371 = vmatprep.subr.mxu0 0.0
  %1372 = vmatpush1.msra.mxu0 0.0
  %1373 = vmatprep.mubr.f32.mxu0 %v1304
  %1374 = vmatmul.mubr.f32.gmra.mrb[0].mxu0 %v1268
  %v1375 = vpop.f32.mrb[0].mxu0
  %v1376 = vadd.f32 %v1301, %v1375
  %v1377 = vpop.f32.mrb[0].mxu0
  %1378 = vmatprep.mubr.f32.mxu0 %v1307
  %1379 = vmatmul.mubr.f32.gmra.mrb[0].mxu0 %v1270
  %v1380 = vpop.f32.mrb[0].mxu0
  %v1381 = vadd.f32 %v1301, %v1380
  %v1382 = vpop.f32.mrb[0].mxu0
  %1383 = vdwg.mxu0
  %vm1384 = vcmask 39936
  %1385 = vst.msk [vmem:[%s19] sm:$0xff] %vm1384, %v1376
  %1386 = vst.msk [vmem:[%s19 + $0x8] sm:$0xff] %vm1384, %v1381
  // Predicated region
  $region78: #{tpu_custom_call.1} parent=0 // pred_check
    _
  $region79: #{tpu_custom_call.1} parent=0 // pred_check_branch
    %1388 = sbr.rel (0) target = $region81
  $region80: #{tpu_custom_call.1} parent=0 // pred_region
    _
  $region81: #{tpu_custom_call.1} parent=0 // pred_fallthru
    _
  // Predicated region
  $region82: #{tpu_custom_call.1} parent=0 // pred_check
    _
  $region83: #{tpu_custom_call.1} parent=0 // pred_check_branch
    %1390 = sbr.rel (0) target = $region85
  $region84: #{tpu_custom_call.1} parent=0 // pred_region
    _
  $region85: #{tpu_custom_call.1} parent=0 // pred_fallthru
    _

</llo_original>
